<compile_context>
chip_gen: v7x
topology: tpu7x:2x2x1
jax: 0.10.0
libtpu: 0.0.40
codegen_flags: <defaults>
</compile_context>

<pallas_src>
import functools

import jax
import jax.numpy as jnp
from jax import lax
from jax.experimental import pallas as pl
from jax.experimental.pallas import tpu as pltpu


# ----------------------------------------------------------------------------
# numerics helpers
# ----------------------------------------------------------------------------
def _elu(x):
    # ELU(alpha=1); exp only ever sees non-positive inputs (no overflow, EUP slot).
    return jnp.where(x > 0.0, x, jnp.exp(jnp.minimum(x, 0.0)) - 1.0)


# ----------------------------------------------------------------------------
# the fused forward kernel (single invocation, everything VMEM resident)
# ----------------------------------------------------------------------------
def _encoder_kernel(*refs, B, T1, encode_info, eps):
    n_layers = len(encode_info)
    assert len(refs) == 7 + 8 * n_layers
    xw_ref, tidx_ref, wbd_ref, specb_ref, spatw_ref, spatb_ref = refs[:6]
    layer_refs = refs[6:6 + 8 * n_layers]
    out_ref = refs[6 + 8 * n_layers]

    BW = B * T1
    inv_cnt = 1.0 / float(BW)           # BN count: N * H * W with H == 1
    t_idx = tidx_ref[...]               # (1, BW) time index within each batch segment

    # ---- stage 1: spectral Conv2d(1,4,(1,K0)) as one MXU dot (block-diag weight) + ELU
    spec = jnp.dot(wbd_ref[...], xw_ref[...], preferred_element_type=jnp.float32)
    spec = _elu(spec + specb_ref[...])                       # (4*E, B*T1)

    # ---- stage 2: spatial Conv2d(4,16,(E,1)) as one MXU dot + ELU
    h = jnp.dot(spatw_ref[...], spec, preferred_element_type=jnp.float32)
    h = _elu(h + spatb_ref[...])                             # (16, B*T1)

    # ---- stage 3: bac_layer (SeparableConv2d blocks), batch folded into lanes
    for li, (cin, cout, ksz, pad) in enumerate(encode_info):
        (dw_w, dw_b, dw_g, dw_bt, pw_w, pw_b, pw_g, pw_bt) = \
            layer_refs[8 * li:8 * li + 8]

        # depthwise FIR along time: taps are XLU rolls of the register-resident
        # activations; a mask zeroes lanes where a tap would cross a batch
        # boundary (i.e. read the zero padding).  pltpu.roll follows jnp.roll
        # semantics (result[j] = x[(j - shift) mod BW]), so shift = -d gives
        # shifted[j] = h[j + d].
        dw = dw_w[pad] * h                                   # centre tap, d == 0
        for kw in range(ksz):
            d = kw - pad
            if d == 0:
                continue
            shifted = pltpu.roll(h, shift=(-d) % BW, axis=1)
            if d > 0:
                valid = t_idx < float(T1 - d)
            else:
                valid = t_idx >= float(-d)
            dw = dw + dw_w[kw] * jnp.where(valid, shifted, 0.0)
        dw = dw + dw_b[...]                                  # (cin, BW)

        # BatchNorm2d(cin), training-mode batch statistics; one lane reduction
        # per quantity on the folded (cin, B*W) layout.
        s1 = jnp.sum(dw, axis=1, keepdims=True)
        s2 = jnp.sum(dw * dw, axis=1, keepdims=True)
        mean = s1 * inv_cnt
        var = jnp.maximum(s2 * inv_cnt - mean * mean, 0.0)
        scale = dw_g[...] * lax.rsqrt(var + eps)             # (cin, 1)
        shift = dw_bt[...] - mean * scale                    # (cin, 1)

        # pointwise 1x1 conv on the MXU: bf16 operands, f32 accumulation.
        # BN shift folded into the bias (tiny matvec); BN scale applied as a
        # single VPU multiply on the activations.
        w_f32 = pw_w[...]                                    # (cout, cin)
        b_eff = pw_b[...] + jnp.dot(w_f32, shift,
                                    preferred_element_type=jnp.float32)
        xb = (dw * scale).astype(jnp.bfloat16)
        pw = jnp.dot(w_f32.astype(jnp.bfloat16), xb,
                     preferred_element_type=jnp.float32) + b_eff   # (cout, BW)

        # BatchNorm2d(cout) (+ the single surviving ELU after block 0 only).
        s1 = jnp.sum(pw, axis=1, keepdims=True)
        s2 = jnp.sum(pw * pw, axis=1, keepdims=True)
        mean = s1 * inv_cnt
        var = jnp.maximum(s2 * inv_cnt - mean * mean, 0.0)
        scale = pw_g[...] * lax.rsqrt(var + eps)
        shift = pw_bt[...] - mean * scale
        h = pw * scale + shift
        if li == 0:
            h = _elu(h)

    # ---- AdaptiveMaxPool2d(1): per-(batch, channel) max over time, one store.
    cols = [jnp.max(h[:, b * T1:(b + 1) * T1], axis=1, keepdims=True)
            for b in range(B)]
    out_ref[...] = jnp.concatenate(cols, axis=1) if B > 1 else cols[0]


# ----------------------------------------------------------------------------
# wrapper: layout plumbing (im2col, block-diag spectral weight) + pallas_call
# ----------------------------------------------------------------------------
@functools.partial(jax.jit, static_argnames=("fs", "encode_info"))
def sbp_raw_encoder_forward(x, params, *, fs, encode_info):
    """x: (batch, electrode, time) float32 -> (batch, encode_info[-1][1])."""
    B, E, T = x.shape
    K0 = int(fs / 2)
    assert T >= K0, "time axis shorter than the spectral kernel"
    T1 = T - K0 + 1
    BW = B * T1
    n_layers = len(encode_info)
    C_last = encode_info[-1][1] if n_layers else 16
    assert params["spat_w"].shape == (16, 4, E, 1)

    prev = 16
    for (cin, cout, ksz, pad) in encode_info:
        assert cin == prev, "encode_info channel chain must start at 16"
        # TODO(synk): only the height-preserving case (ksz == 2*pad + 1) is
        # implemented; other shapes would need a full 2-D depthwise sweep.
        assert ksz == 2 * pad + 1, "need ksz == 2*pad + 1 so the height stays 1"
        prev = cout

    xf = x.astype(jnp.float32)

    # -- one-time layout plumbing (runs once under jit, negligible cost) -------
    # im2col of the raw input for the spectral FIR: xw[e*K0+k, b*T1+t] = x[b,e,t+k]
    gather_idx = jnp.arange(K0)[:, None] + jnp.arange(T1)[None, :]      # (K0, T1)
    win = xf[:, :, gather_idx]                                          # (B, E, K0, T1)
    xw = jnp.transpose(win, (1, 2, 0, 3)).reshape(E * K0, BW)

    # block-diagonal spectral weight: W_bd[co*E+e, e2*K0+k] = spec_w[co,k]*(e==e2)
    spec_w = params["spec_w"].reshape(4, K0).astype(jnp.float32)
    eye_e = jnp.eye(E, dtype=jnp.float32)
    w_bd = (spec_w[:, None, None, :] * eye_e[None, :, :, None]).reshape(4 * E, E * K0)
    spec_b = jnp.repeat(params["spec_b"].astype(jnp.float32), E).reshape(4 * E, 1)

    spat_w = params["spat_w"][:, :, :, 0].reshape(16, 4 * E).astype(jnp.float32)
    spat_b = params["spat_b"].reshape(16, 1).astype(jnp.float32)

    # time-within-segment index used by the depthwise batch-boundary masks
    t_idx = jnp.tile(jnp.arange(T1, dtype=jnp.float32), B).reshape(1, BW)

    def vmem():
        return pl.BlockSpec(memory_space=pltpu.MemorySpace.VMEM)

    args = [xw, t_idx, w_bd, spec_b, spat_w, spat_b]
    in_specs = [vmem() for _ in args]
    for i, (cin, cout, ksz, pad) in enumerate(encode_info):
        dw_row = params[f"dw{i}_w"][:, 0, pad, :]                           # (cin, ksz) centre row
        dw_w = jnp.transpose(dw_row, (1, 0))[..., None].astype(jnp.float32)  # (ksz, cin, 1)
        args += [
            dw_w,
            params[f"dw{i}_b"].reshape(cin, 1).astype(jnp.float32),
            params[f"bn_dw{i}_gamma"].reshape(cin, 1).astype(jnp.float32),
            params[f"bn_dw{i}_beta"].reshape(cin, 1).astype(jnp.float32),
            params[f"pw{i}_w"][:, :, 0, 0].astype(jnp.float32),             # (cout, cin)
            params[f"pw{i}_b"].reshape(cout, 1).astype(jnp.float32),
            params[f"bn_pw{i}_gamma"].reshape(cout, 1).astype(jnp.float32),
            params[f"bn_pw{i}_beta"].reshape(cout, 1).astype(jnp.float32),
        ]
        in_specs += [vmem() for _ in range(8)]

    kernel = functools.partial(
        _encoder_kernel, B=B, T1=T1, encode_info=tuple(encode_info), eps=1e-5)

    out_t = pl.pallas_call(
        kernel,
        out_shape=jax.ShapeDtypeStruct((C_last, B), jnp.float32),
        in_specs=in_specs,
        out_specs=pl.BlockSpec(memory_space=pltpu.MemorySpace.VMEM),
        compiler_params=pltpu.CompilerParams(
            # total working set (< 1 MiB) fits every generation's VMEM,
            # including v7x's 64 MiB per-TensorCore budget.
            vmem_limit_bytes=32 * 1024 * 1024),
    )(*args)

    return out_t.T          # (B, C_last); matches maxpool(x).squeeze() for B > 1


# ----------------------------------------------------------------------------
# parameter construction (deterministic, shapes match the PyTorch module)
# ----------------------------------------------------------------------------
def init_params(key, fs, electrode, encode_info):
    K0 = int(fs / 2)
    E = electrode
    keys = iter(jax.random.split(key, 4 + 4 * len(encode_info)))

    def xavier(k, shape, fan_in, fan_out):
        bound = float((6.0 / (fan_in + fan_out)) ** 0.5)
        return jax.random.uniform(k, shape, jnp.float32, -bound, bound)

    def default_uniform(k, shape, fan_in):
        bound = float(1.0 / (fan_in ** 0.5))
        return jax.random.uniform(k, shape, jnp.float32, -bound, bound)

    p = {}
    # spectral Conv2d(1, 4, (1, K0)) -- xavier_uniform weight
    p["spec_w"] = xavier(next(keys), (4, 1, 1, K0), 1 * K0, 4 * K0)
    p["spec_b"] = default_uniform(next(keys), (4,), 1 * K0)
    # spatial Conv2d(4, 16, (E, 1)) -- xavier_uniform weight
    p["spat_w"] = xavier(next(keys), (16, 4, E, 1), 4 * E, 16 * E)
    p["spat_b"] = default_uniform(next(keys), (16,), 4 * E)
    for i, (cin, cout, ksz, pad) in enumerate(encode_info):
        # TODO(synk): nn.SeparableConv2d internals are assumed (depthwise k x k
        # grouped conv + BN + pointwise 1x1 conv + BN, both with bias).
        p[f"dw{i}_w"] = default_uniform(next(keys), (cin, 1, ksz, ksz), ksz * ksz)
        p[f"dw{i}_b"] = default_uniform(next(keys), (cin,), ksz * ksz)
        p[f"bn_dw{i}_gamma"] = jnp.ones((cin,), jnp.float32)
        p[f"bn_dw{i}_beta"] = jnp.zeros((cin,), jnp.float32)
        p[f"pw{i}_w"] = default_uniform(next(keys), (cout, cin, 1, 1), cin)
        p[f"pw{i}_b"] = default_uniform(next(keys), (cout,), cin)
        p[f"bn_pw{i}_gamma"] = jnp.ones((cout,), jnp.float32)
        p[f"bn_pw{i}_beta"] = jnp.zeros((cout,), jnp.float32)
    return p


if __name__ == "__main__":
    fs = 16                                      # spectral kernel K0 = 8 taps
    electrode = 4
    encode_info = ((16, 32, 3, 1), (32, 64, 3, 1))
    B, T = 2, 135                                # T - K0 + 1 = 128: lane-dense time axis

    key = jax.random.PRNGKey(0)
    kx, kp = jax.random.split(key)
    x = jax.random.normal(kx, (B, electrode, T), jnp.float32)
    params = init_params(kp, fs, electrode, encode_info)

    out = sbp_raw_encoder_forward(x, params, fs=fs, encode_info=encode_info)
    out = jax.block_until_ready(out)
    assert out.shape == (B, encode_info[-1][1]), out.shape
    assert bool(jnp.all(jnp.isfinite(out)))
    print("KERNEL_OK")
</pallas_src>

<mosaic_0001>
module attributes {stable_mosaic.version = 11 : i64} {
  func.func @_encoder_kernel(%arg0: memref<32x256xf32, #tpu.memory_space<vmem>>, %arg1: memref<1x256xf32, #tpu.memory_space<vmem>>, %arg2: memref<16x32xf32, #tpu.memory_space<vmem>>, %arg3: memref<16x1xf32, #tpu.memory_space<vmem>>, %arg4: memref<16x16xf32, #tpu.memory_space<vmem>>, %arg5: memref<16x1xf32, #tpu.memory_space<vmem>>, %arg6: memref<3x16x1xf32, #tpu.memory_space<vmem>>, %arg7: memref<16x1xf32, #tpu.memory_space<vmem>>, %arg8: memref<16x1xf32, #tpu.memory_space<vmem>>, %arg9: memref<16x1xf32, #tpu.memory_space<vmem>>, %arg10: memref<32x16xf32, #tpu.memory_space<vmem>>, %arg11: memref<32x1xf32, #tpu.memory_space<vmem>>, %arg12: memref<32x1xf32, #tpu.memory_space<vmem>>, %arg13: memref<32x1xf32, #tpu.memory_space<vmem>>, %arg14: memref<3x32x1xf32, #tpu.memory_space<vmem>>, %arg15: memref<32x1xf32, #tpu.memory_space<vmem>>, %arg16: memref<32x1xf32, #tpu.memory_space<vmem>>, %arg17: memref<32x1xf32, #tpu.memory_space<vmem>>, %arg18: memref<64x32xf32, #tpu.memory_space<vmem>>, %arg19: memref<64x1xf32, #tpu.memory_space<vmem>>, %arg20: memref<64x1xf32, #tpu.memory_space<vmem>>, %arg21: memref<64x1xf32, #tpu.memory_space<vmem>>, %arg22: memref<64x2xf32, #tpu.memory_space<vmem>>) attributes {dimension_semantics = [], scalar_prefetch = 0 : i64, scratch_operands = 0 : i64, tpu.core_type = #tpu.core_type<tc>} {
    %c0 = arith.constant 0 : index
    %c0_0 = arith.constant 0 : index
    %0 = vector.load %arg1[%c0, %c0_0] : memref<1x256xf32, #tpu.memory_space<vmem>>, vector<1x256xf32>
    %c0_1 = arith.constant 0 : index
    %c0_2 = arith.constant 0 : index
    %1 = vector.load %arg2[%c0_1, %c0_2] : memref<16x32xf32, #tpu.memory_space<vmem>>, vector<16x32xf32>
    %c0_3 = arith.constant 0 : index
    %c0_4 = arith.constant 0 : index
    %2 = vector.load %arg0[%c0_3, %c0_4] : memref<32x256xf32, #tpu.memory_space<vmem>>, vector<32x256xf32>
    %cst = arith.constant dense<0.000000e+00> : vector<16x256xf32>
    %3 = tpu.matmul %1, %2, %cst {dimension_numbers = #tpu.dot_dimension_numbers<[1], [0], [0], [1], [0, 0, 1, 1], [], []>} : vector<16x32xf32>, vector<32x256xf32>, vector<16x256xf32> -> vector<16x256xf32>
    %c0_5 = arith.constant 0 : index
    %c0_6 = arith.constant 0 : index
    %4 = vector.load %arg3[%c0_5, %c0_6] : memref<16x1xf32, #tpu.memory_space<vmem>>, vector<16x1xf32>
    %5 = vector.broadcast %4 : vector<16x1xf32> to vector<16x256xf32>
    %6 = arith.addf %3, %5 : vector<16x256xf32>
    %cst_7 = arith.constant 0.000000e+00 : f32
    %7 = vector.broadcast %cst_7 : f32 to vector<16x256xf32>
    %8 = arith.cmpf ogt, %6, %7 : vector<16x256xf32>
    %cst_8 = arith.constant 0.000000e+00 : f32
    %9 = vector.broadcast %cst_8 : f32 to vector<16x256xf32>
    %10 = arith.minimumf %6, %9 : vector<16x256xf32>
    %11 = math.exp %10 : vector<16x256xf32>
    %cst_9 = arith.constant 1.000000e+00 : f32
    %12 = vector.broadcast %cst_9 : f32 to vector<16x256xf32>
    %13 = arith.subf %11, %12 : vector<16x256xf32>
    %14 = arith.select %8, %6, %13 : vector<16x256xi1>, vector<16x256xf32>
    %c0_10 = arith.constant 0 : index
    %c0_11 = arith.constant 0 : index
    %15 = vector.load %arg4[%c0_10, %c0_11] : memref<16x16xf32, #tpu.memory_space<vmem>>, vector<16x16xf32>
    %cst_12 = arith.constant dense<0.000000e+00> : vector<16x256xf32>
    %16 = tpu.matmul %15, %14, %cst_12 {dimension_numbers = #tpu.dot_dimension_numbers<[1], [0], [0], [1], [0, 0, 1, 1], [], []>} : vector<16x16xf32>, vector<16x256xf32>, vector<16x256xf32> -> vector<16x256xf32>
    %c0_13 = arith.constant 0 : index
    %c0_14 = arith.constant 0 : index
    %17 = vector.load %arg5[%c0_13, %c0_14] : memref<16x1xf32, #tpu.memory_space<vmem>>, vector<16x1xf32>
    %18 = vector.broadcast %17 : vector<16x1xf32> to vector<16x256xf32>
    %19 = arith.addf %16, %18 : vector<16x256xf32>
    %cst_15 = arith.constant 0.000000e+00 : f32
    %20 = vector.broadcast %cst_15 : f32 to vector<16x256xf32>
    %21 = arith.cmpf ogt, %19, %20 : vector<16x256xf32>
    %cst_16 = arith.constant 0.000000e+00 : f32
    %22 = vector.broadcast %cst_16 : f32 to vector<16x256xf32>
    %23 = arith.minimumf %19, %22 : vector<16x256xf32>
    %24 = math.exp %23 : vector<16x256xf32>
    %cst_17 = arith.constant 1.000000e+00 : f32
    %25 = vector.broadcast %cst_17 : f32 to vector<16x256xf32>
    %26 = arith.subf %24, %25 : vector<16x256xf32>
    %27 = arith.select %21, %19, %26 : vector<16x256xi1>, vector<16x256xf32>
    %c1 = arith.constant 1 : index
    %c0_18 = arith.constant 0 : index
    %c0_19 = arith.constant 0 : index
    %28 = vector.load %arg6[%c1, %c0_18, %c0_19] : memref<3x16x1xf32, #tpu.memory_space<vmem>>, vector<1x16x1xf32>
    %29 = vector.shape_cast %28 : vector<1x16x1xf32> to vector<16x1xf32>
    %30 = vector.broadcast %29 : vector<16x1xf32> to vector<16x256xf32>
    %31 = arith.mulf %30, %27 : vector<16x256xf32>
    %c1_i32 = arith.constant 1 : i32
    %32 = tpu.dynamic_rotate %27 by %c1_i32 dim 1 : vector<16x256xf32>, i32 -> vector<16x256xf32>
    %cst_20 = arith.constant 1.000000e+00 : f32
    %33 = vector.broadcast %cst_20 : f32 to vector<1x256xf32>
    %34 = arith.cmpf oge, %0, %33 : vector<1x256xf32>
    %c0_21 = arith.constant 0 : index
    %c0_22 = arith.constant 0 : index
    %c0_23 = arith.constant 0 : index
    %35 = vector.load %arg6[%c0_21, %c0_22, %c0_23] : memref<3x16x1xf32, #tpu.memory_space<vmem>>, vector<1x16x1xf32>
    %36 = vector.shape_cast %35 : vector<1x16x1xf32> to vector<16x1xf32>
    %cst_24 = arith.constant 0.000000e+00 : f32
    %37 = vector.shape_cast %34 : vector<1x256xi1> to vector<1x256xi1>
    %38 = vector.broadcast %37 : vector<1x256xi1> to vector<16x256xi1>
    %39 = vector.broadcast %cst_24 : f32 to vector<16x256xf32>
    %40 = arith.select %38, %32, %39 : vector<16x256xi1>, vector<16x256xf32>
    %41 = vector.broadcast %36 : vector<16x1xf32> to vector<16x256xf32>
    %42 = arith.mulf %41, %40 : vector<16x256xf32>
    %43 = arith.addf %31, %42 : vector<16x256xf32>
    %c255_i32 = arith.constant 255 : i32
    %44 = tpu.dynamic_rotate %27 by %c255_i32 dim 1 : vector<16x256xf32>, i32 -> vector<16x256xf32>
    %cst_25 = arith.constant 1.270000e+02 : f32
    %45 = vector.broadcast %cst_25 : f32 to vector<1x256xf32>
    %46 = arith.cmpf olt, %0, %45 : vector<1x256xf32>
    %c2 = arith.constant 2 : index
    %c0_26 = arith.constant 0 : index
    %c0_27 = arith.constant 0 : index
    %47 = vector.load %arg6[%c2, %c0_26, %c0_27] : memref<3x16x1xf32, #tpu.memory_space<vmem>>, vector<1x16x1xf32>
    %48 = vector.shape_cast %47 : vector<1x16x1xf32> to vector<16x1xf32>
    %cst_28 = arith.constant 0.000000e+00 : f32
    %49 = vector.shape_cast %46 : vector<1x256xi1> to vector<1x256xi1>
    %50 = vector.broadcast %49 : vector<1x256xi1> to vector<16x256xi1>
    %51 = vector.broadcast %cst_28 : f32 to vector<16x256xf32>
    %52 = arith.select %50, %44, %51 : vector<16x256xi1>, vector<16x256xf32>
    %53 = vector.broadcast %48 : vector<16x1xf32> to vector<16x256xf32>
    %54 = arith.mulf %53, %52 : vector<16x256xf32>
    %55 = arith.addf %43, %54 : vector<16x256xf32>
    %c0_29 = arith.constant 0 : index
    %c0_30 = arith.constant 0 : index
    %56 = vector.load %arg7[%c0_29, %c0_30] : memref<16x1xf32, #tpu.memory_space<vmem>>, vector<16x1xf32>
    %57 = vector.broadcast %56 : vector<16x1xf32> to vector<16x256xf32>
    %58 = arith.addf %55, %57 : vector<16x256xf32>
    %cst_31 = arith.constant dense<0.000000e+00> : vector<16xf32>
    %59 = vector.multi_reduction <add>, %58, %cst_31 [1] : vector<16x256xf32> to vector<16xf32>
    %60 = vector.shape_cast %59 : vector<16xf32> to vector<16x1xf32>
    %61 = arith.mulf %58, %58 : vector<16x256xf32>
    %cst_32 = arith.constant dense<0.000000e+00> : vector<16xf32>
    %62 = vector.multi_reduction <add>, %61, %cst_32 [1] : vector<16x256xf32> to vector<16xf32>
    %63 = vector.shape_cast %62 : vector<16xf32> to vector<16x1xf32>
    %cst_33 = arith.constant 3.906250e-03 : f32
    %64 = vector.broadcast %cst_33 : f32 to vector<16x1xf32>
    %65 = arith.mulf %60, %64 : vector<16x1xf32>
    %cst_34 = arith.constant 3.906250e-03 : f32
    %66 = vector.broadcast %cst_34 : f32 to vector<16x1xf32>
    %67 = arith.mulf %63, %66 : vector<16x1xf32>
    %68 = arith.mulf %65, %65 : vector<16x1xf32>
    %69 = arith.subf %67, %68 : vector<16x1xf32>
    %cst_35 = arith.constant 0.000000e+00 : f32
    %70 = vector.broadcast %cst_35 : f32 to vector<16x1xf32>
    %71 = arith.maximumf %69, %70 : vector<16x1xf32>
    %c0_36 = arith.constant 0 : index
    %c0_37 = arith.constant 0 : index
    %72 = vector.load %arg8[%c0_36, %c0_37] : memref<16x1xf32, #tpu.memory_space<vmem>>, vector<16x1xf32>
    %cst_38 = arith.constant 9.99999974E-6 : f32
    %73 = vector.broadcast %cst_38 : f32 to vector<16x1xf32>
    %74 = arith.addf %71, %73 : vector<16x1xf32>
    %75 = math.rsqrt %74 : vector<16x1xf32>
    %76 = arith.mulf %72, %75 : vector<16x1xf32>
    %c0_39 = arith.constant 0 : index
    %c0_40 = arith.constant 0 : index
    %77 = vector.load %arg9[%c0_39, %c0_40] : memref<16x1xf32, #tpu.memory_space<vmem>>, vector<16x1xf32>
    %78 = arith.mulf %65, %76 : vector<16x1xf32>
    %79 = arith.subf %77, %78 : vector<16x1xf32>
    %c0_41 = arith.constant 0 : index
    %c0_42 = arith.constant 0 : index
    %80 = vector.load %arg10[%c0_41, %c0_42] : memref<32x16xf32, #tpu.memory_space<vmem>>, vector<32x16xf32>
    %c0_43 = arith.constant 0 : index
    %c0_44 = arith.constant 0 : index
    %81 = vector.load %arg11[%c0_43, %c0_44] : memref<32x1xf32, #tpu.memory_space<vmem>>, vector<32x1xf32>
    %cst_45 = arith.constant dense<0.000000e+00> : vector<32x1xf32>
    %82 = tpu.matmul %80, %79, %cst_45 {dimension_numbers = #tpu.dot_dimension_numbers<[1], [0], [0], [1], [0, 0, 1, 1], [], []>} : vector<32x16xf32>, vector<16x1xf32>, vector<32x1xf32> -> vector<32x1xf32>
    %83 = arith.addf %81, %82 : vector<32x1xf32>
    %84 = vector.broadcast %76 : vector<16x1xf32> to vector<16x256xf32>
    %85 = arith.mulf %58, %84 : vector<16x256xf32>
    %86 = arith.truncf %85 : vector<16x256xf32> to vector<16x256xbf16>
    %87 = arith.truncf %80 : vector<32x16xf32> to vector<32x16xbf16>
    %cst_46 = arith.constant dense<0.000000e+00> : vector<32x256xf32>
    %88 = tpu.matmul %87, %86, %cst_46 {dimension_numbers = #tpu.dot_dimension_numbers<[1], [0], [0], [1], [0, 0, 1, 1], [], []>} : vector<32x16xbf16>, vector<16x256xbf16>, vector<32x256xf32> -> vector<32x256xf32>
    %89 = vector.broadcast %83 : vector<32x1xf32> to vector<32x256xf32>
    %90 = arith.addf %88, %89 : vector<32x256xf32>
    %cst_47 = arith.constant dense<0.000000e+00> : vector<32xf32>
    %91 = vector.multi_reduction <add>, %90, %cst_47 [1] : vector<32x256xf32> to vector<32xf32>
    %92 = vector.shape_cast %91 : vector<32xf32> to vector<32x1xf32>
    %93 = arith.mulf %90, %90 : vector<32x256xf32>
    %cst_48 = arith.constant dense<0.000000e+00> : vector<32xf32>
    %94 = vector.multi_reduction <add>, %93, %cst_48 [1] : vector<32x256xf32> to vector<32xf32>
    %95 = vector.shape_cast %94 : vector<32xf32> to vector<32x1xf32>
    %cst_49 = arith.constant 3.906250e-03 : f32
    %96 = vector.broadcast %cst_49 : f32 to vector<32x1xf32>
    %97 = arith.mulf %92, %96 : vector<32x1xf32>
    %cst_50 = arith.constant 3.906250e-03 : f32
    %98 = vector.broadcast %cst_50 : f32 to vector<32x1xf32>
    %99 = arith.mulf %95, %98 : vector<32x1xf32>
    %100 = arith.mulf %97, %97 : vector<32x1xf32>
    %101 = arith.subf %99, %100 : vector<32x1xf32>
    %cst_51 = arith.constant 0.000000e+00 : f32
    %102 = vector.broadcast %cst_51 : f32 to vector<32x1xf32>
    %103 = arith.maximumf %101, %102 : vector<32x1xf32>
    %c0_52 = arith.constant 0 : index
    %c0_53 = arith.constant 0 : index
    %104 = vector.load %arg12[%c0_52, %c0_53] : memref<32x1xf32, #tpu.memory_space<vmem>>, vector<32x1xf32>
    %cst_54 = arith.constant 9.99999974E-6 : f32
    %105 = vector.broadcast %cst_54 : f32 to vector<32x1xf32>
    %106 = arith.addf %103, %105 : vector<32x1xf32>
    %107 = math.rsqrt %106 : vector<32x1xf32>
    %108 = arith.mulf %104, %107 : vector<32x1xf32>
    %c0_55 = arith.constant 0 : index
    %c0_56 = arith.constant 0 : index
    %109 = vector.load %arg13[%c0_55, %c0_56] : memref<32x1xf32, #tpu.memory_space<vmem>>, vector<32x1xf32>
    %110 = arith.mulf %97, %108 : vector<32x1xf32>
    %111 = arith.subf %109, %110 : vector<32x1xf32>
    %112 = vector.broadcast %108 : vector<32x1xf32> to vector<32x256xf32>
    %113 = arith.mulf %90, %112 : vector<32x256xf32>
    %114 = vector.broadcast %111 : vector<32x1xf32> to vector<32x256xf32>
    %115 = arith.addf %113, %114 : vector<32x256xf32>
    %cst_57 = arith.constant 0.000000e+00 : f32
    %116 = vector.broadcast %cst_57 : f32 to vector<32x256xf32>
    %117 = arith.cmpf ogt, %115, %116 : vector<32x256xf32>
    %cst_58 = arith.constant 0.000000e+00 : f32
    %118 = vector.broadcast %cst_58 : f32 to vector<32x256xf32>
    %119 = arith.minimumf %115, %118 : vector<32x256xf32>
    %120 = math.exp %119 : vector<32x256xf32>
    %cst_59 = arith.constant 1.000000e+00 : f32
    %121 = vector.broadcast %cst_59 : f32 to vector<32x256xf32>
    %122 = arith.subf %120, %121 : vector<32x256xf32>
    %123 = arith.select %117, %115, %122 : vector<32x256xi1>, vector<32x256xf32>
    %c1_60 = arith.constant 1 : index
    %c0_61 = arith.constant 0 : index
    %c0_62 = arith.constant 0 : index
    %124 = vector.load %arg14[%c1_60, %c0_61, %c0_62] : memref<3x32x1xf32, #tpu.memory_space<vmem>>, vector<1x32x1xf32>
    %125 = vector.shape_cast %124 : vector<1x32x1xf32> to vector<32x1xf32>
    %126 = vector.broadcast %125 : vector<32x1xf32> to vector<32x256xf32>
    %127 = arith.mulf %126, %123 : vector<32x256xf32>
    %c1_i32_63 = arith.constant 1 : i32
    %128 = tpu.dynamic_rotate %123 by %c1_i32_63 dim 1 : vector<32x256xf32>, i32 -> vector<32x256xf32>
    %cst_64 = arith.constant 1.000000e+00 : f32
    %129 = vector.broadcast %cst_64 : f32 to vector<1x256xf32>
    %130 = arith.cmpf oge, %0, %129 : vector<1x256xf32>
    %c0_65 = arith.constant 0 : index
    %c0_66 = arith.constant 0 : index
    %c0_67 = arith.constant 0 : index
    %131 = vector.load %arg14[%c0_65, %c0_66, %c0_67] : memref<3x32x1xf32, #tpu.memory_space<vmem>>, vector<1x32x1xf32>
    %132 = vector.shape_cast %131 : vector<1x32x1xf32> to vector<32x1xf32>
    %cst_68 = arith.constant 0.000000e+00 : f32
    %133 = vector.shape_cast %130 : vector<1x256xi1> to vector<1x256xi1>
    %134 = vector.broadcast %133 : vector<1x256xi1> to vector<32x256xi1>
    %135 = vector.broadcast %cst_68 : f32 to vector<32x256xf32>
    %136 = arith.select %134, %128, %135 : vector<32x256xi1>, vector<32x256xf32>
    %137 = vector.broadcast %132 : vector<32x1xf32> to vector<32x256xf32>
    %138 = arith.mulf %137, %136 : vector<32x256xf32>
    %139 = arith.addf %127, %138 : vector<32x256xf32>
    %c255_i32_69 = arith.constant 255 : i32
    %140 = tpu.dynamic_rotate %123 by %c255_i32_69 dim 1 : vector<32x256xf32>, i32 -> vector<32x256xf32>
    %cst_70 = arith.constant 1.270000e+02 : f32
    %141 = vector.broadcast %cst_70 : f32 to vector<1x256xf32>
    %142 = arith.cmpf olt, %0, %141 : vector<1x256xf32>
    %c2_71 = arith.constant 2 : index
    %c0_72 = arith.constant 0 : index
    %c0_73 = arith.constant 0 : index
    %143 = vector.load %arg14[%c2_71, %c0_72, %c0_73] : memref<3x32x1xf32, #tpu.memory_space<vmem>>, vector<1x32x1xf32>
    %144 = vector.shape_cast %143 : vector<1x32x1xf32> to vector<32x1xf32>
    %cst_74 = arith.constant 0.000000e+00 : f32
    %145 = vector.shape_cast %142 : vector<1x256xi1> to vector<1x256xi1>
    %146 = vector.broadcast %145 : vector<1x256xi1> to vector<32x256xi1>
    %147 = vector.broadcast %cst_74 : f32 to vector<32x256xf32>
    %148 = arith.select %146, %140, %147 : vector<32x256xi1>, vector<32x256xf32>
    %149 = vector.broadcast %144 : vector<32x1xf32> to vector<32x256xf32>
    %150 = arith.mulf %149, %148 : vector<32x256xf32>
    %151 = arith.addf %139, %150 : vector<32x256xf32>
    %c0_75 = arith.constant 0 : index
    %c0_76 = arith.constant 0 : index
    %152 = vector.load %arg15[%c0_75, %c0_76] : memref<32x1xf32, #tpu.memory_space<vmem>>, vector<32x1xf32>
    %153 = vector.broadcast %152 : vector<32x1xf32> to vector<32x256xf32>
    %154 = arith.addf %151, %153 : vector<32x256xf32>
    %cst_77 = arith.constant dense<0.000000e+00> : vector<32xf32>
    %155 = vector.multi_reduction <add>, %154, %cst_77 [1] : vector<32x256xf32> to vector<32xf32>
    %156 = vector.shape_cast %155 : vector<32xf32> to vector<32x1xf32>
    %157 = arith.mulf %154, %154 : vector<32x256xf32>
    %cst_78 = arith.constant dense<0.000000e+00> : vector<32xf32>
    %158 = vector.multi_reduction <add>, %157, %cst_78 [1] : vector<32x256xf32> to vector<32xf32>
    %159 = vector.shape_cast %158 : vector<32xf32> to vector<32x1xf32>
    %cst_79 = arith.constant 3.906250e-03 : f32
    %160 = vector.broadcast %cst_79 : f32 to vector<32x1xf32>
    %161 = arith.mulf %156, %160 : vector<32x1xf32>
    %cst_80 = arith.constant 3.906250e-03 : f32
    %162 = vector.broadcast %cst_80 : f32 to vector<32x1xf32>
    %163 = arith.mulf %159, %162 : vector<32x1xf32>
    %164 = arith.mulf %161, %161 : vector<32x1xf32>
    %165 = arith.subf %163, %164 : vector<32x1xf32>
    %cst_81 = arith.constant 0.000000e+00 : f32
    %166 = vector.broadcast %cst_81 : f32 to vector<32x1xf32>
    %167 = arith.maximumf %165, %166 : vector<32x1xf32>
    %c0_82 = arith.constant 0 : index
    %c0_83 = arith.constant 0 : index
    %168 = vector.load %arg16[%c0_82, %c0_83] : memref<32x1xf32, #tpu.memory_space<vmem>>, vector<32x1xf32>
    %cst_84 = arith.constant 9.99999974E-6 : f32
    %169 = vector.broadcast %cst_84 : f32 to vector<32x1xf32>
    %170 = arith.addf %167, %169 : vector<32x1xf32>
    %171 = math.rsqrt %170 : vector<32x1xf32>
    %172 = arith.mulf %168, %171 : vector<32x1xf32>
    %c0_85 = arith.constant 0 : index
    %c0_86 = arith.constant 0 : index
    %173 = vector.load %arg17[%c0_85, %c0_86] : memref<32x1xf32, #tpu.memory_space<vmem>>, vector<32x1xf32>
    %174 = arith.mulf %161, %172 : vector<32x1xf32>
    %175 = arith.subf %173, %174 : vector<32x1xf32>
    %c0_87 = arith.constant 0 : index
    %c0_88 = arith.constant 0 : index
    %176 = vector.load %arg18[%c0_87, %c0_88] : memref<64x32xf32, #tpu.memory_space<vmem>>, vector<64x32xf32>
    %c0_89 = arith.constant 0 : index
    %c0_90 = arith.constant 0 : index
    %177 = vector.load %arg19[%c0_89, %c0_90] : memref<64x1xf32, #tpu.memory_space<vmem>>, vector<64x1xf32>
    %cst_91 = arith.constant dense<0.000000e+00> : vector<64x1xf32>
    %178 = tpu.matmul %176, %175, %cst_91 {dimension_numbers = #tpu.dot_dimension_numbers<[1], [0], [0], [1], [0, 0, 1, 1], [], []>} : vector<64x32xf32>, vector<32x1xf32>, vector<64x1xf32> -> vector<64x1xf32>
    %179 = arith.addf %177, %178 : vector<64x1xf32>
    %180 = vector.broadcast %172 : vector<32x1xf32> to vector<32x256xf32>
    %181 = arith.mulf %154, %180 : vector<32x256xf32>
    %182 = arith.truncf %181 : vector<32x256xf32> to vector<32x256xbf16>
    %183 = arith.truncf %176 : vector<64x32xf32> to vector<64x32xbf16>
    %cst_92 = arith.constant dense<0.000000e+00> : vector<64x256xf32>
    %184 = tpu.matmul %183, %182, %cst_92 {dimension_numbers = #tpu.dot_dimension_numbers<[1], [0], [0], [1], [0, 0, 1, 1], [], []>} : vector<64x32xbf16>, vector<32x256xbf16>, vector<64x256xf32> -> vector<64x256xf32>
    %185 = vector.broadcast %179 : vector<64x1xf32> to vector<64x256xf32>
    %186 = arith.addf %184, %185 : vector<64x256xf32>
    %cst_93 = arith.constant dense<0.000000e+00> : vector<64xf32>
    %187 = vector.multi_reduction <add>, %186, %cst_93 [1] : vector<64x256xf32> to vector<64xf32>
    %188 = vector.shape_cast %187 : vector<64xf32> to vector<64x1xf32>
    %189 = arith.mulf %186, %186 : vector<64x256xf32>
    %cst_94 = arith.constant dense<0.000000e+00> : vector<64xf32>
    %190 = vector.multi_reduction <add>, %189, %cst_94 [1] : vector<64x256xf32> to vector<64xf32>
    %191 = vector.shape_cast %190 : vector<64xf32> to vector<64x1xf32>
    %cst_95 = arith.constant 3.906250e-03 : f32
    %192 = vector.broadcast %cst_95 : f32 to vector<64x1xf32>
    %193 = arith.mulf %188, %192 : vector<64x1xf32>
    %cst_96 = arith.constant 3.906250e-03 : f32
    %194 = vector.broadcast %cst_96 : f32 to vector<64x1xf32>
    %195 = arith.mulf %191, %194 : vector<64x1xf32>
    %196 = arith.mulf %193, %193 : vector<64x1xf32>
    %197 = arith.subf %195, %196 : vector<64x1xf32>
    %cst_97 = arith.constant 0.000000e+00 : f32
    %198 = vector.broadcast %cst_97 : f32 to vector<64x1xf32>
    %199 = arith.maximumf %197, %198 : vector<64x1xf32>
    %c0_98 = arith.constant 0 : index
    %c0_99 = arith.constant 0 : index
    %200 = vector.load %arg20[%c0_98, %c0_99] : memref<64x1xf32, #tpu.memory_space<vmem>>, vector<64x1xf32>
    %cst_100 = arith.constant 9.99999974E-6 : f32
    %201 = vector.broadcast %cst_100 : f32 to vector<64x1xf32>
    %202 = arith.addf %199, %201 : vector<64x1xf32>
    %203 = math.rsqrt %202 : vector<64x1xf32>
    %204 = arith.mulf %200, %203 : vector<64x1xf32>
    %c0_101 = arith.constant 0 : index
    %c0_102 = arith.constant 0 : index
    %205 = vector.load %arg21[%c0_101, %c0_102] : memref<64x1xf32, #tpu.memory_space<vmem>>, vector<64x1xf32>
    %206 = arith.mulf %193, %204 : vector<64x1xf32>
    %207 = arith.subf %205, %206 : vector<64x1xf32>
    %208 = vector.broadcast %204 : vector<64x1xf32> to vector<64x256xf32>
    %209 = arith.mulf %186, %208 : vector<64x256xf32>
    %210 = vector.broadcast %207 : vector<64x1xf32> to vector<64x256xf32>
    %211 = arith.addf %209, %210 : vector<64x256xf32>
    %212 = vector.extract_strided_slice %211 {offsets = [0, 0], sizes = [64, 128], strides = [1, 1]} : vector<64x256xf32> to vector<64x128xf32>
    %cst_103 = arith.constant dense<0xFF800000> : vector<64xf32>
    %213 = vector.multi_reduction <maximumf>, %212, %cst_103 [1] : vector<64x128xf32> to vector<64xf32>
    %214 = vector.shape_cast %213 : vector<64xf32> to vector<64x1xf32>
    %215 = vector.extract_strided_slice %211 {offsets = [0, 128], sizes = [64, 128], strides = [1, 1]} : vector<64x256xf32> to vector<64x128xf32>
    %cst_104 = arith.constant dense<0xFF800000> : vector<64xf32>
    %216 = vector.multi_reduction <maximumf>, %215, %cst_104 [1] : vector<64x128xf32> to vector<64xf32>
    %217 = vector.shape_cast %216 : vector<64xf32> to vector<64x1xf32>
    %218 = tpu.concatenate %214, %217 in 1 : vector<64x1xf32>, vector<64x1xf32> -> vector<64x2xf32>
    %c0_105 = arith.constant 0 : index
    %c0_106 = arith.constant 0 : index
    %219 = vector.load %arg22[%c0_105, %c0_106] : memref<64x2xf32, #tpu.memory_space<vmem>>, vector<64x2xf32>
    tpu.vector_store %arg22[%c0_105, %c0_106], %218 {strides = array<i32>} : memref<64x2xf32, #tpu.memory_space<vmem>>, vector<64x2xf32>,
    return
  }
}

</mosaic_0001>

<llo_original>
// kernel: sbp_raw_encoder_forward.1
$region0: #{sbp_raw_encoder_forward.1}
  #allocation0 [shape = 'u32[]', space=smem, size = 0x4, offset = 0x4, fixed_abs, tag = 'smem constant byte address 0x4 - core index']
  #allocation1 [shape = 'u32[144,128]{1,0:T(1,128)}', space=vmem, size = 0x12000, scoped, tag = 'internal scratch']
  %s0 = inlined_call_operand.vmem [shape: f32[32,256], index: 0, kind: input, shape index: {}]
  %s1 = inlined_call_operand.vmem [shape: f32[1,256], index: 1, kind: input, shape index: {}]
  %s2 = inlined_call_operand.vmem [shape: f32[16,32], index: 2, kind: input, shape index: {}]
  %s3 = inlined_call_operand.vmem [shape: f32[16,1], index: 3, kind: input, shape index: {}]
  %s4 = inlined_call_operand.vmem [shape: f32[16,16], index: 4, kind: input, shape index: {}]
  %s5 = inlined_call_operand.vmem [shape: f32[16,1], index: 5, kind: input, shape index: {}]
  %s6 = inlined_call_operand.vmem [shape: f32[3,16,1], index: 6, kind: input, shape index: {}]
  %s7 = inlined_call_operand.vmem [shape: f32[16,1], index: 7, kind: input, shape index: {}]
  %s8 = inlined_call_operand.vmem [shape: f32[16,1], index: 8, kind: input, shape index: {}]
  %s9 = inlined_call_operand.vmem [shape: f32[16,1], index: 9, kind: input, shape index: {}]
  %s10 = inlined_call_operand.vmem [shape: f32[32,16], index: 10, kind: input, shape index: {}]
  %s11 = inlined_call_operand.vmem [shape: f32[32,1], index: 11, kind: input, shape index: {}]
  %s12 = inlined_call_operand.vmem [shape: f32[32,1], index: 12, kind: input, shape index: {}]
  %s13 = inlined_call_operand.vmem [shape: f32[32,1], index: 13, kind: input, shape index: {}]
  %s14 = inlined_call_operand.vmem [shape: f32[3,32,1], index: 14, kind: input, shape index: {}]
  %s15 = inlined_call_operand.vmem [shape: f32[32,1], index: 15, kind: input, shape index: {}]
  %s16 = inlined_call_operand.vmem [shape: f32[32,1], index: 16, kind: input, shape index: {}]
  %s17 = inlined_call_operand.vmem [shape: f32[32,1], index: 17, kind: input, shape index: {}]
  %s18 = inlined_call_operand.vmem [shape: f32[64,32], index: 18, kind: input, shape index: {}]
  %s19 = inlined_call_operand.vmem [shape: f32[64,1], index: 19, kind: input, shape index: {}]
  %s20 = inlined_call_operand.vmem [shape: f32[64,1], index: 20, kind: input, shape index: {}]
  %s21 = inlined_call_operand.vmem [shape: f32[64,1], index: 21, kind: input, shape index: {}]
  %s22 = inlined_call_operand.vmem [shape: f32[64,2], index: 22, kind: output, shape index: {}]
  %s23 = sld [smem:[#allocation0]]
  $region98: #{sbp_raw_encoder_forward.1} parent=0
    _
  %s25 = ssub.s32 1, %s23
  %s26 = scalar_select 0, %s25, %s23
  // Predicated region
  $region2: #{sbp_raw_encoder_forward.1} parent=0 // pred_check
    _
  $region3: #{sbp_raw_encoder_forward.1} parent=0 // pred_check_branch
    %28 = sbr.rel (0) target = $region5
  $region4: #{sbp_raw_encoder_forward.1} parent=0 // pred_region
    _
  $region5: #{sbp_raw_encoder_forward.1} parent=0 // pred_fallthru
    _
  // Predicated region
  $region6: #{sbp_raw_encoder_forward.1} parent=0 // pred_check
    _
  $region7: #{sbp_raw_encoder_forward.1} parent=0 // pred_check_branch
    %30 = sbr.rel (0) target = $region9
  $region8: #{sbp_raw_encoder_forward.1} parent=0 // pred_region
    _
  $region9: #{sbp_raw_encoder_forward.1} parent=0 // pred_fallthru
    _
  // Predicated region
  $region10: #{sbp_raw_encoder_forward.1} parent=0 // pred_check
    _
  $region11: #{sbp_raw_encoder_forward.1} parent=0 // pred_check_branch
    %32 = sbr.rel (0) target = $region13
  $region12: #{sbp_raw_encoder_forward.1} parent=0 // pred_region
    _
  $region13: #{sbp_raw_encoder_forward.1} parent=0 // pred_fallthru
    _
  // Predicated region
  $region14: #{sbp_raw_encoder_forward.1} parent=0 // pred_check
    _
  $region15: #{sbp_raw_encoder_forward.1} parent=0 // pred_check_branch
    %34 = sbr.rel (0) target = $region17
  $region16: #{sbp_raw_encoder_forward.1} parent=0 // pred_region
    _
  $region17: #{sbp_raw_encoder_forward.1} parent=0 // pred_fallthru
    _
  // Predicated region
  $region18: #{sbp_raw_encoder_forward.1} parent=0 // pred_check
    _
  $region19: #{sbp_raw_encoder_forward.1} parent=0 // pred_check_branch
    %36 = sbr.rel (0) target = $region21
  $region20: #{sbp_raw_encoder_forward.1} parent=0 // pred_region
    _
  $region21: #{sbp_raw_encoder_forward.1} parent=0 // pred_fallthru
    _
  // Predicated region
  $region22: #{sbp_raw_encoder_forward.1} parent=0 // pred_check
    _
  $region23: #{sbp_raw_encoder_forward.1} parent=0 // pred_check_branch
    %38 = sbr.rel (0) target = $region25
  $region24: #{sbp_raw_encoder_forward.1} parent=0 // pred_region
    _
  $region25: #{sbp_raw_encoder_forward.1} parent=0 // pred_fallthru
    _
  // Predicated region
  $region26: #{sbp_raw_encoder_forward.1} parent=0 // pred_check
    _
  $region27: #{sbp_raw_encoder_forward.1} parent=0 // pred_check_branch
    %40 = sbr.rel (0) target = $region29
  $region28: #{sbp_raw_encoder_forward.1} parent=0 // pred_region
    _
  $region29: #{sbp_raw_encoder_forward.1} parent=0 // pred_fallthru
    _
  // Predicated region
  $region30: #{sbp_raw_encoder_forward.1} parent=0 // pred_check
    _
  $region31: #{sbp_raw_encoder_forward.1} parent=0 // pred_check_branch
    %42 = sbr.rel (0) target = $region33
  $region32: #{sbp_raw_encoder_forward.1} parent=0 // pred_region
    _
  $region33: #{sbp_raw_encoder_forward.1} parent=0 // pred_fallthru
    _
  // Predicated region
  $region34: #{sbp_raw_encoder_forward.1} parent=0 // pred_check
    _
  $region35: #{sbp_raw_encoder_forward.1} parent=0 // pred_check_branch
    %44 = sbr.rel (0) target = $region37
  $region36: #{sbp_raw_encoder_forward.1} parent=0 // pred_region
    _
  $region37: #{sbp_raw_encoder_forward.1} parent=0 // pred_fallthru
    _
  // Predicated region
  $region38: #{sbp_raw_encoder_forward.1} parent=0 // pred_check
    _
  $region39: #{sbp_raw_encoder_forward.1} parent=0 // pred_check_branch
    %46 = sbr.rel (0) target = $region41
  $region40: #{sbp_raw_encoder_forward.1} parent=0 // pred_region
    _
  $region41: #{sbp_raw_encoder_forward.1} parent=0 // pred_fallthru
    _
  // Predicated region
  $region42: #{sbp_raw_encoder_forward.1} parent=0 // pred_check
    _
  $region43: #{sbp_raw_encoder_forward.1} parent=0 // pred_check_branch
    %48 = sbr.rel (0) target = $region45
  $region44: #{sbp_raw_encoder_forward.1} parent=0 // pred_region
    _
  $region45: #{sbp_raw_encoder_forward.1} parent=0 // pred_fallthru
    _
  // Predicated region
  $region46: #{sbp_raw_encoder_forward.1} parent=0 // pred_check
    _
  $region47: #{sbp_raw_encoder_forward.1} parent=0 // pred_check_branch
    %50 = sbr.rel (0) target = $region49
  $region48: #{sbp_raw_encoder_forward.1} parent=0 // pred_region
    _
  $region49: #{sbp_raw_encoder_forward.1} parent=0 // pred_fallthru
    _
  // Predicated region
  $region50: #{sbp_raw_encoder_forward.1} parent=0 // pred_check
    _
  $region51: #{sbp_raw_encoder_forward.1} parent=0 // pred_check_branch
    %52 = sbr.rel (0) target = $region53
  $region52: #{sbp_raw_encoder_forward.1} parent=0 // pred_region
    _
  $region53: #{sbp_raw_encoder_forward.1} parent=0 // pred_fallthru
    _
  // Predicated region
  $region54: #{sbp_raw_encoder_forward.1} parent=0 // pred_check
    _
  $region55: #{sbp_raw_encoder_forward.1} parent=0 // pred_check_branch
    %54 = sbr.rel (0) target = $region57
  $region56: #{sbp_raw_encoder_forward.1} parent=0 // pred_region
    _
  $region57: #{sbp_raw_encoder_forward.1} parent=0 // pred_fallthru
    _
  // Predicated region
  $region58: #{sbp_raw_encoder_forward.1} parent=0 // pred_check
    _
  $region59: #{sbp_raw_encoder_forward.1} parent=0 // pred_check_branch
    %56 = sbr.rel (0) target = $region61
  $region60: #{sbp_raw_encoder_forward.1} parent=0 // pred_region
    _
  $region61: #{sbp_raw_encoder_forward.1} parent=0 // pred_fallthru
    _
  // Predicated region
  $region62: #{sbp_raw_encoder_forward.1} parent=0 // pred_check
    _
  $region63: #{sbp_raw_encoder_forward.1} parent=0 // pred_check_branch
    %58 = sbr.rel (0) target = $region65
  $region64: #{sbp_raw_encoder_forward.1} parent=0 // pred_region
    _
  $region65: #{sbp_raw_encoder_forward.1} parent=0 // pred_fallthru
    _
  // Predicated region
  $region66: #{sbp_raw_encoder_forward.1} parent=0 // pred_check
    _
  $region67: #{sbp_raw_encoder_forward.1} parent=0 // pred_check_branch
    %60 = sbr.rel (0) target = $region69
  $region68: #{sbp_raw_encoder_forward.1} parent=0 // pred_region
    _
  $region69: #{sbp_raw_encoder_forward.1} parent=0 // pred_fallthru
    _
  // Predicated region
  $region70: #{sbp_raw_encoder_forward.1} parent=0 // pred_check
    _
  $region71: #{sbp_raw_encoder_forward.1} parent=0 // pred_check_branch
    %62 = sbr.rel (0) target = $region73
  $region72: #{sbp_raw_encoder_forward.1} parent=0 // pred_region
    _
  $region73: #{sbp_raw_encoder_forward.1} parent=0 // pred_fallthru
    _
  // Predicated region
  $region74: #{sbp_raw_encoder_forward.1} parent=0 // pred_check
    _
  $region75: #{sbp_raw_encoder_forward.1} parent=0 // pred_check_branch
    %64 = sbr.rel (0) target = $region77
  $region76: #{sbp_raw_encoder_forward.1} parent=0 // pred_region
    _
  $region77: #{sbp_raw_encoder_forward.1} parent=0 // pred_fallthru
    _
  // Predicated region
  $region78: #{sbp_raw_encoder_forward.1} parent=0 // pred_check
    _
  $region79: #{sbp_raw_encoder_forward.1} parent=0 // pred_check_branch
    %66 = sbr.rel (0) target = $region81
  $region80: #{sbp_raw_encoder_forward.1} parent=0 // pred_region
    _
  $region81: #{sbp_raw_encoder_forward.1} parent=0 // pred_fallthru
    _
  // Predicated region
  $region82: #{sbp_raw_encoder_forward.1} parent=0 // pred_check
    _
  $region83: #{sbp_raw_encoder_forward.1} parent=0 // pred_check_branch
    %68 = sbr.rel (0) target = $region85
  $region84: #{sbp_raw_encoder_forward.1} parent=0 // pred_region
    _
  $region85: #{sbp_raw_encoder_forward.1} parent=0 // pred_fallthru
    _
  // Predicated region
  $region86: #{sbp_raw_encoder_forward.1} parent=0 // pred_check
    _
  $region87: #{sbp_raw_encoder_forward.1} parent=0 // pred_check_branch
    %70 = sbr.rel (0) target = $region89
  $region88: #{sbp_raw_encoder_forward.1} parent=0 // pred_region
    _
  $region89: #{sbp_raw_encoder_forward.1} parent=0 // pred_fallthru
    _
  %v72 = vld [vmem:[%s1] sm:$0x3]
  %v73 = vld [vmem:[%s2] sm:$0xff]
  %v74 = vld [vmem:[%s2 + $0x8] sm:$0xff]
  %v75 = vld [vmem:[%s0] sm:$0xff]
  %v76 = vld [vmem:[%s0 + $0x8] sm:$0xff]
  %v77 = vld [vmem:[%s0 + $0x10] sm:$0xff]
  %v78 = vld [vmem:[%s0 + $0x18] sm:$0xff]
  %v79 = vld [vmem:[%s0 + $0x20] sm:$0xff]
  %v80 = vld [vmem:[%s0 + $0x28] sm:$0xff]
  %v81 = vld [vmem:[%s0 + $0x30] sm:$0xff]
  %v82 = vld [vmem:[%s0 + $0x38] sm:$0xff]
  %v83 = vld [vmem:[%s3] sm:$0xff]
  %v84 = vld [vmem:[%s3 + $0x8] sm:$0xff]
  %86 = vset.pattern.permute.xlu0 0
  %87 = vperm.xlu0 %86, %v83
  %v88 = vpop.permute.xlu0 %87
  %91 = vset.pattern.permute.xlu0 0
  %92 = vperm.xlu0 %91, %v84
  %v93 = vpop.permute.xlu0 %92
  %vm95 = vcmask 261120
  %v97 = vsel %vm95, %v73, 0
  %v100 = vsel %vm95, %v74, 0
  %102 = vmatprep.subr.mxu0 %v76
  %103 = vmatpush1.msra.mxu0 %v75
  %104 = vmatprep.subr.mxu0 %v78
  %105 = vmatpush1.msra.mxu0 %v77
  %106 = vmatprep.subr.mxu0 %v80
  %107 = vmatpush1.msra.mxu0 %v79
  %108 = vmatprep.subr.mxu0 %v82
  %109 = vmatpush1.msra.mxu0 %v81
  %110 = vmatprep.subr.mxu0 0.0
  %111 = vmatpush1.msra.mxu0 0.0
  %112 = vmatprep.subr.mxu0 0.0
  %113 = vmatpush1.msra.mxu0 0.0
  %114 = vmatprep.subr.mxu0 0.0
  %115 = vmatpush1.msra.mxu0 0.0
  %116 = vmatprep.subr.mxu0 0.0
  %117 = vmatpush1.msra.mxu0 0.0
  %118 = vmatprep.subr.mxu0 0.0
  %119 = vmatpush1.msra.mxu0 0.0
  %120 = vmatprep.subr.mxu0 0.0
  %121 = vmatpush1.msra.mxu0 0.0
  %122 = vmatprep.subr.mxu0 0.0
  %123 = vmatpush1.msra.mxu0 0.0
  %124 = vmatprep.subr.mxu0 0.0
  %125 = vmatpush1.msra.mxu0 0.0
  %126 = vmatprep.subr.mxu0 0.0
  %127 = vmatpush1.msra.mxu0 0.0
  %128 = vmatprep.subr.mxu0 0.0
  %129 = vmatpush1.msra.mxu0 0.0
  %130 = vmatprep.subr.mxu0 0.0
  %131 = vmatpush1.msra.mxu0 0.0
  %132 = vmatprep.subr.mxu0 0.0
  %133 = vmatpush1.msra.mxu0 0.0
  %134 = vmatprep.subr.mxu0 0.0
  %135 = vmatpush1.msra.mxu0 0.0
  %136 = vmatprep.subr.mxu0 0.0
  %137 = vmatpush1.msra.mxu0 0.0
  %138 = vmatprep.subr.mxu0 0.0
  %139 = vmatpush1.msra.mxu0 0.0
  %140 = vmatprep.subr.mxu0 0.0
  %141 = vmatpush1.msra.mxu0 0.0
  %142 = vmatprep.subr.mxu0 0.0
  %143 = vmatpush1.msra.mxu0 0.0
  %144 = vmatprep.subr.mxu0 0.0
  %145 = vmatpush1.msra.mxu0 0.0
  %146 = vmatprep.subr.mxu0 0.0
  %147 = vmatpush1.msra.mxu0 0.0
  %148 = vmatprep.subr.mxu0 0.0
  %149 = vmatpush1.msra.mxu0 0.0
  %150 = vmatprep.subr.mxu0 0.0
  %151 = vmatpush1.msra.mxu0 0.0
  %152 = vmatprep.subr.mxu0 0.0
  %153 = vmatpush1.msra.mxu0 0.0
  %154 = vmatprep.subr.mxu0 0.0
  %155 = vmatpush1.msra.mxu0 0.0
  %156 = vmatprep.subr.mxu0 0.0
  %157 = vmatpush1.msra.mxu0 0.0
  %158 = vmatprep.subr.mxu0 0.0
  %159 = vmatpush1.msra.mxu0 0.0
  %160 = vmatprep.subr.mxu0 0.0
  %161 = vmatpush1.msra.mxu0 0.0
  %162 = vmatprep.subr.mxu0 0.0
  %163 = vmatpush1.msra.mxu0 0.0
  %164 = vmatprep.subr.mxu0 0.0
  %165 = vmatpush1.msra.mxu0 0.0
  %166 = vmatprep.mubr.f32.mxu0 0.0
  %167 = vmatmul.mubr.f32.gmra.mrb[0].mxu0 %v97
  %v168 = vpop.f32.mrb[0].mxu0
  %v169 = vadd.f32 %v88, %v168
  %v170 = vpop.f32.mrb[0].mxu0
  %v171 = vadd.f32 %v88, %v170
  %172 = vmatprep.mubr.f32.mxu0 0.0
  %173 = vmatmul.mubr.f32.gmra.mrb[0].mxu0 %v100
  %v174 = vpop.f32.mrb[0].mxu0
  %v175 = vadd.f32 %v93, %v174
  %v176 = vpop.f32.mrb[0].mxu0
  %v177 = vadd.f32 %v93, %v176
  %178 = vdwg.mxu0
  %vm179 = vcmp.gt.f32.partialorder %v169, 0.0
  %vm180 = vcmp.gt.f32.partialorder %v171, 0.0
  %vm181 = vcmp.gt.f32.partialorder %v175, 0.0
  %vm182 = vcmp.gt.f32.partialorder %v177, 0.0
  %v183 = vmin.f32 %v169, 0.0
  %v184 = vmin.f32 %v171, 0.0
  %v185 = vmin.f32 %v175, 0.0
  %v186 = vmin.f32 %v177, 0.0
  %v187 = vmul.f32 %v183, 1.442695
  %v188 = vpow.pop %v187
  %v189 = vmul.f32 %v184, 1.442695
  %v190 = vpow.pop %v189
  %v191 = vmul.f32 %v185, 1.442695
  %v192 = vpow.pop %v191
  %v193 = vmul.f32 %v186, 1.442695
  %v194 = vpow.pop %v193
  %v195 = vsub.f32 %v188, 1.0
  %v196 = vsub.f32 %v190, 1.0
  %v197 = vsub.f32 %v192, 1.0
  %v198 = vsub.f32 %v194, 1.0
  %v199 = vsel %vm179, %v169, %v195
  %v200 = vsel %vm180, %v171, %v196
  %v201 = vsel %vm181, %v175, %v197
  %v202 = vsel %vm182, %v177, %v198
  %v203 = vld [vmem:[%s4] sm:$0xff]
  %v204 = vld [vmem:[%s4 + $0x8] sm:$0xff]
  %v205 = vld [vmem:[%s5] sm:$0xff]
  %v206 = vld [vmem:[%s5 + $0x8] sm:$0xff]
  %208 = vset.pattern.permute.xlu0 0
  %209 = vperm.xlu0 %208, %v205
  %v210 = vpop.permute.xlu0 %209
  %213 = vset.pattern.permute.xlu0 0
  %214 = vperm.xlu0 %213, %v206
  %v215 = vpop.permute.xlu0 %214
  %vm217 = vcmask 130048
  %v219 = vsel %vm217, %v203, 0
  %v222 = vsel %vm217, %v204, 0
  %224 = vmatprep.subr.mxu0 %v200
  %225 = vmatpush1.msra.mxu0 %v199
  %226 = vmatprep.subr.mxu0 %v202
  %227 = vmatpush1.msra.mxu0 %v201
  %228 = vmatprep.subr.mxu0 0.0
  %229 = vmatpush1.msra.mxu0 0.0
  %230 = vmatprep.subr.mxu0 0.0
  %231 = vmatpush1.msra.mxu0 0.0
  %232 = vmatprep.subr.mxu0 0.0
  %233 = vmatpush1.msra.mxu0 0.0
  %234 = vmatprep.subr.mxu0 0.0
  %235 = vmatpush1.msra.mxu0 0.0
  %236 = vmatprep.subr.mxu0 0.0
  %237 = vmatpush1.msra.mxu0 0.0
  %238 = vmatprep.subr.mxu0 0.0
  %239 = vmatpush1.msra.mxu0 0.0
  %240 = vmatprep.subr.mxu0 0.0
  %241 = vmatpush1.msra.mxu0 0.0
  %242 = vmatprep.subr.mxu0 0.0
  %243 = vmatpush1.msra.mxu0 0.0
  %244 = vmatprep.subr.mxu0 0.0
  %245 = vmatpush1.msra.mxu0 0.0
  %246 = vmatprep.subr.mxu0 0.0
  %247 = vmatpush1.msra.mxu0 0.0
  %248 = vmatprep.subr.mxu0 0.0
  %249 = vmatpush1.msra.mxu0 0.0
  %250 = vmatprep.subr.mxu0 0.0
  %251 = vmatpush1.msra.mxu0 0.0
  %252 = vmatprep.subr.mxu0 0.0
  %253 = vmatpush1.msra.mxu0 0.0
  %254 = vmatprep.subr.mxu0 0.0
  %255 = vmatpush1.msra.mxu0 0.0
  %256 = vmatprep.subr.mxu0 0.0
  %257 = vmatpush1.msra.mxu0 0.0
  %258 = vmatprep.subr.mxu0 0.0
  %259 = vmatpush1.msra.mxu0 0.0
  %260 = vmatprep.subr.mxu0 0.0
  %261 = vmatpush1.msra.mxu0 0.0
  %262 = vmatprep.subr.mxu0 0.0
  %263 = vmatpush1.msra.mxu0 0.0
  %264 = vmatprep.subr.mxu0 0.0
  %265 = vmatpush1.msra.mxu0 0.0
  %266 = vmatprep.subr.mxu0 0.0
  %267 = vmatpush1.msra.mxu0 0.0
  %268 = vmatprep.subr.mxu0 0.0
  %269 = vmatpush1.msra.mxu0 0.0
  %270 = vmatprep.subr.mxu0 0.0
  %271 = vmatpush1.msra.mxu0 0.0
  %272 = vmatprep.subr.mxu0 0.0
  %273 = vmatpush1.msra.mxu0 0.0
  %274 = vmatprep.subr.mxu0 0.0
  %275 = vmatpush1.msra.mxu0 0.0
  %276 = vmatprep.subr.mxu0 0.0
  %277 = vmatpush1.msra.mxu0 0.0
  %278 = vmatprep.subr.mxu0 0.0
  %279 = vmatpush1.msra.mxu0 0.0
  %280 = vmatprep.subr.mxu0 0.0
  %281 = vmatpush1.msra.mxu0 0.0
  %282 = vmatprep.subr.mxu0 0.0
  %283 = vmatpush1.msra.mxu0 0.0
  %284 = vmatprep.subr.mxu0 0.0
  %285 = vmatpush1.msra.mxu0 0.0
  %286 = vmatprep.subr.mxu0 0.0
  %287 = vmatpush1.msra.mxu0 0.0
  %288 = vmatprep.mubr.f32.mxu0 0.0
  %289 = vmatmul.mubr.f32.gmra.mrb[0].mxu0 %v219
  %v290 = vpop.f32.mrb[0].mxu0
  %v291 = vadd.f32 %v210, %v290
  %v292 = vpop.f32.mrb[0].mxu0
  %v293 = vadd.f32 %v210, %v292
  %294 = vmatprep.mubr.f32.mxu0 0.0
  %295 = vmatmul.mubr.f32.gmra.mrb[0].mxu0 %v222
  %v296 = vpop.f32.mrb[0].mxu0
  %v297 = vadd.f32 %v215, %v296
  %v298 = vpop.f32.mrb[0].mxu0
  %v299 = vadd.f32 %v215, %v298
  %300 = vdwg.mxu0
  %vm301 = vcmp.gt.f32.partialorder %v291, 0.0
  %vm302 = vcmp.gt.f32.partialorder %v293, 0.0
  %vm303 = vcmp.gt.f32.partialorder %v297, 0.0
  %vm304 = vcmp.gt.f32.partialorder %v299, 0.0
  %v305 = vmin.f32 %v291, 0.0
  %v306 = vmin.f32 %v293, 0.0
  %v307 = vmin.f32 %v297, 0.0
  %v308 = vmin.f32 %v299, 0.0
  %v309 = vmul.f32 %v305, 1.442695
  %v310 = vpow.pop %v309
  %v311 = vmul.f32 %v306, 1.442695
  %v312 = vpow.pop %v311
  %v313 = vmul.f32 %v307, 1.442695
  %v314 = vpow.pop %v313
  %v315 = vmul.f32 %v308, 1.442695
  %v316 = vpow.pop %v315
  %v317 = vsub.f32 %v310, 1.0
  %v318 = vsub.f32 %v312, 1.0
  %v319 = vsub.f32 %v314, 1.0
  %v320 = vsub.f32 %v316, 1.0
  %v321 = vsel %vm301, %v291, %v317
  %v322 = vsel %vm302, %v293, %v318
  %v323 = vsel %vm303, %v297, %v319
  %v324 = vsel %vm304, %v299, %v320
  %s325 = scalar_lea.vmem %s6, 16
  %v326 = vld [vmem:[%s325] sm:$0xff]
  %v327 = vld [vmem:[%s325 + $0x8] sm:$0xff]
  %329 = vset.pattern.permute.xlu0 0
  %330 = vperm.xlu0 %329, %v326
  %v331 = vpop.permute.xlu0 %330
  %334 = vset.pattern.permute.xlu0 0
  %335 = vperm.xlu0 %334, %v327
  %v336 = vpop.permute.xlu0 %335
  %v338 = vmul.f32 %v331, %v321
  %v339 = vmul.f32 %v331, %v322
  %v340 = vmul.f32 %v336, %v323
  %v341 = vmul.f32 %v336, %v324
  %342 = vrot.lane.b32.xlu0 %v321, 1
  %v343 = vpop.permute.xlu0 %342
  %344 = vrot.lane.b32.xlu0 %v323, 1
  %v345 = vpop.permute.xlu0 %344
  %346 = vrot.lane.b32.xlu0 %v322, 1
  %v347 = vpop.permute.xlu0 %346
  %348 = vrot.lane.b32.xlu0 %v324, 1
  %v349 = vpop.permute.xlu0 %348
  %v350 = vlaneseq
  %v351 = vand.u32 %v350, 127
  %vm352 = vcmp.lt.s32.totalorder %v351, 1
  %v353 = vsel %vm352, %v343, %v347
  %v354 = vsel %vm352, %v345, %v349
  %v355 = vsel %vm352, %v347, %v343
  %v356 = vsel %vm352, %v349, %v345
  %vm357 = vcmp.ge.f32.partialorder %v72, 1.0
  %v358 = vld [vmem:[%s6] sm:$0xff]
  %v359 = vld [vmem:[%s6 + $0x8] sm:$0xff]
  %v360 = vsel %vm357, 1, 0
  %v361 = vlaneseq
  %v362 = vshrl.u32 %v361, 7
  %v363 = vsub.s32 0, %v362
  %v364 = vrot.slane %v360, %v363
  %v365 = vlaneseq
  %v366 = vshrl.u32 %v365, 7
  %v367 = vsub.s32 1, %v366
  %v368 = vrot.slane %v360, %v367
  %vm369 = vcmp.eq.s32.totalorder %v364, 1
  %vm370 = vcmp.eq.s32.totalorder %v368, 1
  %v371 = vsel %vm369, %v355, 0.0
  %v372 = vsel %vm370, %v353, 0.0
  %v373 = vsel %vm369, %v356, 0.0
  %v374 = vsel %vm370, %v354, 0.0
  %376 = vset.pattern.permute.xlu0 0
  %377 = vperm.xlu0 %376, %v358
  %v378 = vpop.permute.xlu0 %377
  %381 = vset.pattern.permute.xlu0 0
  %382 = vperm.xlu0 %381, %v359
  %v383 = vpop.permute.xlu0 %382
  %v385 = vmul.f32 %v378, %v371
  %v386 = vmul.f32 %v378, %v372
  %v387 = vmul.f32 %v383, %v373
  %v388 = vmul.f32 %v383, %v374
  %v389 = vadd.f32 %v338, %v385
  %v390 = vadd.f32 %v339, %v386
  %v391 = vadd.f32 %v340, %v387
  %v392 = vadd.f32 %v341, %v388
  %393 = vrot.lane.b32.xlu0 %v321, 127
  %v394 = vpop.permute.xlu0 %393
  %395 = vrot.lane.b32.xlu0 %v323, 127
  %v396 = vpop.permute.xlu0 %395
  %397 = vrot.lane.b32.xlu0 %v322, 127
  %v398 = vpop.permute.xlu0 %397
  %399 = vrot.lane.b32.xlu0 %v324, 127
  %v400 = vpop.permute.xlu0 %399
  %vm401 = vcmp.lt.s32.totalorder %v351, 127
  %v402 = vsel %vm401, %v394, %v398
  %v403 = vsel %vm401, %v396, %v400
  %v404 = vsel %vm401, %v398, %v394
  %v405 = vsel %vm401, %v400, %v396
  %vm406 = vcmp.lt.f32.partialorder %v72, 127.0
  %s407 = scalar_lea.vmem %s6, 32
  %v408 = vld [vmem:[%s407] sm:$0xff]
  %v409 = vld [vmem:[%s407 + $0x8] sm:$0xff]
  %v410 = vsel %vm406, 1, 0
  %v411 = vlaneseq
  %v412 = vshrl.u32 %v411, 7
  %v413 = vsub.s32 0, %v412
  %v414 = vrot.slane %v410, %v413
  %v415 = vlaneseq
  %v416 = vshrl.u32 %v415, 7
  %v417 = vsub.s32 1, %v416
  %v418 = vrot.slane %v410, %v417
  %vm419 = vcmp.eq.s32.totalorder %v414, 1
  %vm420 = vcmp.eq.s32.totalorder %v418, 1
  %v421 = vsel %vm419, %v402, 0.0
  %v422 = vsel %vm420, %v404, 0.0
  %v423 = vsel %vm419, %v403, 0.0
  %v424 = vsel %vm420, %v405, 0.0
  %426 = vset.pattern.permute.xlu0 0
  %427 = vperm.xlu0 %426, %v408
  %v428 = vpop.permute.xlu0 %427
  %431 = vset.pattern.permute.xlu0 0
  %432 = vperm.xlu0 %431, %v409
  %v433 = vpop.permute.xlu0 %432
  %v435 = vmul.f32 %v428, %v421
  %v436 = vmul.f32 %v428, %v422
  %v437 = vmul.f32 %v433, %v423
  %v438 = vmul.f32 %v433, %v424
  %v439 = vadd.f32 %v389, %v435
  %v440 = vadd.f32 %v390, %v436
  %v441 = vadd.f32 %v391, %v437
  %v442 = vadd.f32 %v392, %v438
  %v443 = vld [vmem:[%s7] sm:$0xff]
  %v444 = vld [vmem:[%s7 + $0x8] sm:$0xff]
  %446 = vset.pattern.permute.xlu0 0
  %447 = vperm.xlu0 %446, %v443
  %v448 = vpop.permute.xlu0 %447
  %451 = vset.pattern.permute.xlu0 0
  %452 = vperm.xlu0 %451, %v444
  %v453 = vpop.permute.xlu0 %452
  %v455 = vadd.f32 %v439, %v448
  %v456 = vadd.f32 %v440, %v448
  %v457 = vadd.f32 %v441, %v453
  %v458 = vadd.f32 %v442, %v453
  %v459 = vadd.f32 %v455, %v456
  %460 = vadd.xlane.f32.xlu0 %v459
  %v461 = vpop.xlane.xlu0 %460
  %v462 = vadd.f32 %v457, %v458
  %463 = vadd.xlane.f32.xlu0 %v462
  %v464 = vpop.xlane.xlu0 %463
  %v465 = vmul.f32 %v455, %v455
  %v466 = vmul.f32 %v456, %v456
  %v467 = vmul.f32 %v457, %v457
  %v468 = vmul.f32 %v458, %v458
  %v469 = vadd.f32 %v465, %v466
  %470 = vadd.xlane.f32.xlu0 %v469
  %v471 = vpop.xlane.xlu0 %470
  %v472 = vadd.f32 %v467, %v468
  %473 = vadd.xlane.f32.xlu0 %v472
  %v474 = vpop.xlane.xlu0 %473
  %v475 = vmul.f32 %v461, 0.00390625
  %v476 = vmul.f32 %v464, 0.00390625
  %v477 = vmul.f32 %v471, 0.00390625
  %v478 = vmul.f32 %v474, 0.00390625
  %v479 = vmul.f32 %v475, %v475
  %v480 = vmul.f32 %v476, %v476
  %v481 = vsub.f32 %v477, %v479
  %v482 = vsub.f32 %v478, %v480
  %v483 = vmax.f32 %v481, 0.0
  %v484 = vmax.f32 %v482, 0.0
  %v485 = vld [vmem:[%s8] sm:$0xff]
  %v486 = vld [vmem:[%s8 + $0x8] sm:$0xff]
  %v487 = vadd.f32 %v483, 1e-05
  %v488 = vadd.f32 %v484, 1e-05
  %v489 = vrsqrt.pop %v487
  %v490 = vrsqrt.pop %v488
  %v491 = vmul.f32 %v485, %v489
  %v492 = vmul.f32 %v486, %v490
  %v493 = vld [vmem:[%s9] sm:$0xff]
  %v494 = vld [vmem:[%s9 + $0x8] sm:$0xff]
  %v495 = vmul.f32 %v475, %v491
  %v496 = vmul.f32 %v476, %v492
  %v497 = vsub.f32 %v493, %v495
  %v498 = vsub.f32 %v494, %v496
  %v499 = vld [vmem:[%s10] sm:$0xff]
  %v500 = vld [vmem:[%s10 + $0x8] sm:$0xff]
  %v501 = vld [vmem:[%s10 + $0x10] sm:$0xff]
  %v502 = vld [vmem:[%s10 + $0x18] sm:$0xff]
  %v503 = vld [vmem:[%s11] sm:$0xff]
  %v504 = vld [vmem:[%s11 + $0x8] sm:$0xff]
  %v505 = vld [vmem:[%s11 + $0x10] sm:$0xff]
  %v506 = vld [vmem:[%s11 + $0x18] sm:$0xff]
  %v508 = vsel %vm217, %v499, 0
  %v511 = vsel %vm217, %v500, 0
  %v514 = vsel %vm217, %v501, 0
  %v517 = vsel %vm217, %v502, 0
  %519 = vmatprep.subr.mxu0 0.0
  %520 = vmatpush1.msra.mxu0 %v497
  %521 = vmatprep.subr.mxu0 0.0
  %522 = vmatpush1.msra.mxu0 %v498
  %523 = vmatprep.subr.mxu0 0.0
  %524 = vmatpush1.msra.mxu0 0.0
  %525 = vmatprep.subr.mxu0 0.0
  %526 = vmatpush1.msra.mxu0 0.0
  %527 = vmatprep.subr.mxu0 0.0
  %528 = vmatpush1.msra.mxu0 0.0
  %529 = vmatprep.subr.mxu0 0.0
  %530 = vmatpush1.msra.mxu0 0.0
  %531 = vmatprep.subr.mxu0 0.0
  %532 = vmatpush1.msra.mxu0 0.0
  %533 = vmatprep.subr.mxu0 0.0
  %534 = vmatpush1.msra.mxu0 0.0
  %535 = vmatprep.subr.mxu0 0.0
  %536 = vmatpush1.msra.mxu0 0.0
  %537 = vmatprep.subr.mxu0 0.0
  %538 = vmatpush1.msra.mxu0 0.0
  %539 = vmatprep.subr.mxu0 0.0
  %540 = vmatpush1.msra.mxu0 0.0
  %541 = vmatprep.subr.mxu0 0.0
  %542 = vmatpush1.msra.mxu0 0.0
  %543 = vmatprep.subr.mxu0 0.0
  %544 = vmatpush1.msra.mxu0 0.0
  %545 = vmatprep.subr.mxu0 0.0
  %546 = vmatpush1.msra.mxu0 0.0
  %547 = vmatprep.subr.mxu0 0.0
  %548 = vmatpush1.msra.mxu0 0.0
  %549 = vmatprep.subr.mxu0 0.0
  %550 = vmatpush1.msra.mxu0 0.0
  %551 = vmatprep.subr.mxu0 0.0
  %552 = vmatpush1.msra.mxu0 0.0
  %553 = vmatprep.subr.mxu0 0.0
  %554 = vmatpush1.msra.mxu0 0.0
  %555 = vmatprep.subr.mxu0 0.0
  %556 = vmatpush1.msra.mxu0 0.0
  %557 = vmatprep.subr.mxu0 0.0
  %558 = vmatpush1.msra.mxu0 0.0
  %559 = vmatprep.subr.mxu0 0.0
  %560 = vmatpush1.msra.mxu0 0.0
  %561 = vmatprep.subr.mxu0 0.0
  %562 = vmatpush1.msra.mxu0 0.0
  %563 = vmatprep.subr.mxu0 0.0
  %564 = vmatpush1.msra.mxu0 0.0
  %565 = vmatprep.subr.mxu0 0.0
  %566 = vmatpush1.msra.mxu0 0.0
  %567 = vmatprep.subr.mxu0 0.0
  %568 = vmatpush1.msra.mxu0 0.0
  %569 = vmatprep.subr.mxu0 0.0
  %570 = vmatpush1.msra.mxu0 0.0
  %571 = vmatprep.subr.mxu0 0.0
  %572 = vmatpush1.msra.mxu0 0.0
  %573 = vmatprep.subr.mxu0 0.0
  %574 = vmatpush1.msra.mxu0 0.0
  %575 = vmatprep.subr.mxu0 0.0
  %576 = vmatpush1.msra.mxu0 0.0
  %577 = vmatprep.subr.mxu0 0.0
  %578 = vmatpush1.msra.mxu0 0.0
  %579 = vmatprep.subr.mxu0 0.0
  %580 = vmatpush1.msra.mxu0 0.0
  %581 = vmatprep.subr.mxu0 0.0
  %582 = vmatpush1.msra.mxu0 0.0
  %583 = vmatprep.mubr.f32.mxu0 0.0
  %584 = vmatmul.mubr.f32.gmra.mrb[0].mxu0 %v508
  %v585 = vpop.f32.mrb[0].mxu0
  %v586 = vadd.f32 0.0, %v585
  %v587 = vpop.f32.mrb[0].mxu0
  %588 = vmatprep.mubr.f32.mxu0 0.0
  %589 = vmatmul.mubr.f32.gmra.mrb[0].mxu0 %v511
  %v590 = vpop.f32.mrb[0].mxu0
  %v591 = vadd.f32 0.0, %v590
  %v592 = vpop.f32.mrb[0].mxu0
  %593 = vmatprep.mubr.f32.mxu0 0.0
  %594 = vmatmul.mubr.f32.gmra.mrb[0].mxu0 %v514
  %v595 = vpop.f32.mrb[0].mxu0
  %v596 = vadd.f32 0.0, %v595
  %v597 = vpop.f32.mrb[0].mxu0
  %598 = vmatprep.mubr.f32.mxu0 0.0
  %599 = vmatmul.mubr.f32.gmra.mrb[0].mxu0 %v517
  %v600 = vpop.f32.mrb[0].mxu0
  %v601 = vadd.f32 0.0, %v600
  %v602 = vpop.f32.mrb[0].mxu0
  %603 = vdwg.mxu0
  %v604 = vadd.f32 %v503, %v586
  %v605 = vadd.f32 %v504, %v591
  %v606 = vadd.f32 %v505, %v596
  %v607 = vadd.f32 %v506, %v601
  %609 = vset.pattern.permute.xlu0 0
  %610 = vperm.xlu0 %609, %v491
  %v611 = vpop.permute.xlu0 %610
  %614 = vset.pattern.permute.xlu0 0
  %615 = vperm.xlu0 %614, %v492
  %v616 = vpop.permute.xlu0 %615
  %v618 = vmul.f32 %v455, %v611
  %v619 = vmul.f32 %v456, %v611
  %v620 = vmul.f32 %v457, %v616
  %v621 = vmul.f32 %v458, %v616
  %v622 = vpack.c.bf16 %v620, %v618
  %v623 = vpack.c.bf16 %v621, %v619
  %v624 = vpack.c.bf16 %v500, %v499
  %v625 = vpack.c.bf16 %v502, %v501
  %627 = vset.pattern.permute.xlu0 0
  %628 = vperm.xlu0 %627, %v604
  %v629 = vpop.permute.xlu0 %628
  %632 = vset.pattern.permute.xlu0 0
  %633 = vperm.xlu0 %632, %v605
  %v634 = vpop.permute.xlu0 %633
  %637 = vset.pattern.permute.xlu0 0
  %638 = vperm.xlu0 %637, %v606
  %v639 = vpop.permute.xlu0 %638
  %642 = vset.pattern.permute.xlu0 0
  %643 = vperm.xlu0 %642, %v607
  %v644 = vpop.permute.xlu0 %643
  %v647 = vsel %vm217, %v624, 0
  %v650 = vsel %vm217, %v625, 0
  %652 = vmatprep.subr.bf16.mxu0 %v623
  %653 = vmatpush1.bf16.msra.mxu0 %v622
  %654 = vmatprep.subr.bf16.mxu0 0
  %655 = vmatpush1.bf16.msra.mxu0 0
  %656 = vmatprep.subr.bf16.mxu0 0
  %657 = vmatpush1.bf16.msra.mxu0 0
  %658 = vmatprep.subr.bf16.mxu0 0
  %659 = vmatpush1.bf16.msra.mxu0 0
  %660 = vmatprep.subr.bf16.mxu0 0
  %661 = vmatpush1.bf16.msra.mxu0 0
  %662 = vmatprep.subr.bf16.mxu0 0
  %663 = vmatpush1.bf16.msra.mxu0 0
  %664 = vmatprep.subr.bf16.mxu0 0
  %665 = vmatpush1.bf16.msra.mxu0 0
  %666 = vmatprep.subr.bf16.mxu0 0
  %667 = vmatpush1.bf16.msra.mxu0 0
  %668 = vmatprep.subr.bf16.mxu0 0
  %669 = vmatpush1.bf16.msra.mxu0 0
  %670 = vmatprep.subr.bf16.mxu0 0
  %671 = vmatpush1.bf16.msra.mxu0 0
  %672 = vmatprep.subr.bf16.mxu0 0
  %673 = vmatpush1.bf16.msra.mxu0 0
  %674 = vmatprep.subr.bf16.mxu0 0
  %675 = vmatpush1.bf16.msra.mxu0 0
  %676 = vmatprep.subr.bf16.mxu0 0
  %677 = vmatpush1.bf16.msra.mxu0 0
  %678 = vmatprep.subr.bf16.mxu0 0
  %679 = vmatpush1.bf16.msra.mxu0 0
  %680 = vmatprep.subr.bf16.mxu0 0
  %681 = vmatpush1.bf16.msra.mxu0 0
  %682 = vmatprep.subr.bf16.mxu0 0
  %683 = vmatpush1.bf16.msra.mxu0 0
  %684 = vmatprep.mubr.bf16.mxu0 0
  %685 = vmatmul.mubr.bf16.gmra.mrb[0].mxu0 %v647
  %v686 = vpop.f32.mrb[0].mxu0
  %v687 = vadd.f32 %v629, %v686
  %v688 = vpop.f32.mrb[0].mxu0
  %v689 = vadd.f32 %v629, %v688
  %v690 = vpop.f32.mrb[0].mxu0
  %v691 = vadd.f32 %v634, %v690
  %v692 = vpop.f32.mrb[0].mxu0
  %v693 = vadd.f32 %v634, %v692
  %694 = vmatprep.mubr.bf16.mxu0 0
  %695 = vmatmul.mubr.bf16.gmra.mrb[0].mxu0 %v650
  %v696 = vpop.f32.mrb[0].mxu0
  %v697 = vadd.f32 %v639, %v696
  %v698 = vpop.f32.mrb[0].mxu0
  %v699 = vadd.f32 %v639, %v698
  %v700 = vpop.f32.mrb[0].mxu0
  %v701 = vadd.f32 %v644, %v700
  %v702 = vpop.f32.mrb[0].mxu0
  %v703 = vadd.f32 %v644, %v702
  %704 = vdwg.mxu0
  %v705 = vadd.f32 %v687, %v689
  %706 = vadd.xlane.f32.xlu0 %v705
  %v707 = vpop.xlane.xlu0 %706
  %v708 = vadd.f32 %v691, %v693
  %709 = vadd.xlane.f32.xlu0 %v708
  %v710 = vpop.xlane.xlu0 %709
  %v711 = vadd.f32 %v697, %v699
  %712 = vadd.xlane.f32.xlu0 %v711
  %v713 = vpop.xlane.xlu0 %712
  %v714 = vadd.f32 %v701, %v703
  %715 = vadd.xlane.f32.xlu0 %v714
  %v716 = vpop.xlane.xlu0 %715
  %v717 = vmul.f32 %v687, %v687
  %v718 = vmul.f32 %v689, %v689
  %v719 = vmul.f32 %v691, %v691
  %v720 = vmul.f32 %v693, %v693
  %v721 = vmul.f32 %v697, %v697
  %v722 = vmul.f32 %v699, %v699
  %v723 = vmul.f32 %v701, %v701
  %v724 = vmul.f32 %v703, %v703
  %v725 = vadd.f32 %v717, %v718
  %726 = vadd.xlane.f32.xlu0 %v725
  %v727 = vpop.xlane.xlu0 %726
  %v728 = vadd.f32 %v719, %v720
  %729 = vadd.xlane.f32.xlu0 %v728
  %v730 = vpop.xlane.xlu0 %729
  %v731 = vadd.f32 %v721, %v722
  %732 = vadd.xlane.f32.xlu0 %v731
  %v733 = vpop.xlane.xlu0 %732
  %v734 = vadd.f32 %v723, %v724
  %735 = vadd.xlane.f32.xlu0 %v734
  %v736 = vpop.xlane.xlu0 %735
  %v737 = vmul.f32 %v707, 0.00390625
  %v738 = vmul.f32 %v710, 0.00390625
  %v739 = vmul.f32 %v713, 0.00390625
  %v740 = vmul.f32 %v716, 0.00390625
  %v741 = vmul.f32 %v727, 0.00390625
  %v742 = vmul.f32 %v730, 0.00390625
  %v743 = vmul.f32 %v733, 0.00390625
  %v744 = vmul.f32 %v736, 0.00390625
  %v745 = vmul.f32 %v737, %v737
  %v746 = vmul.f32 %v738, %v738
  %v747 = vmul.f32 %v739, %v739
  %v748 = vmul.f32 %v740, %v740
  %v749 = vsub.f32 %v741, %v745
  %v750 = vsub.f32 %v742, %v746
  %v751 = vsub.f32 %v743, %v747
  %v752 = vsub.f32 %v744, %v748
  %v753 = vmax.f32 %v749, 0.0
  %v754 = vmax.f32 %v750, 0.0
  %v755 = vmax.f32 %v751, 0.0
  %v756 = vmax.f32 %v752, 0.0
  %v757 = vld [vmem:[%s12] sm:$0xff]
  %v758 = vld [vmem:[%s12 + $0x8] sm:$0xff]
  %v759 = vld [vmem:[%s12 + $0x10] sm:$0xff]
  %v760 = vld [vmem:[%s12 + $0x18] sm:$0xff]
  %v761 = vadd.f32 %v753, 1e-05
  %v762 = vadd.f32 %v754, 1e-05
  %v763 = vadd.f32 %v755, 1e-05
  %v764 = vadd.f32 %v756, 1e-05
  %v765 = vrsqrt.pop %v761
  %v766 = vrsqrt.pop %v762
  %v767 = vrsqrt.pop %v763
  %v768 = vrsqrt.pop %v764
  %v769 = vmul.f32 %v757, %v765
  %v770 = vmul.f32 %v758, %v766
  %v771 = vmul.f32 %v759, %v767
  %v772 = vmul.f32 %v760, %v768
  %v773 = vld [vmem:[%s13] sm:$0xff]
  %v774 = vld [vmem:[%s13 + $0x8] sm:$0xff]
  %v775 = vld [vmem:[%s13 + $0x10] sm:$0xff]
  %v776 = vld [vmem:[%s13 + $0x18] sm:$0xff]
  %v777 = vmul.f32 %v737, %v769
  %v778 = vmul.f32 %v738, %v770
  %v779 = vmul.f32 %v739, %v771
  %v780 = vmul.f32 %v740, %v772
  %v781 = vsub.f32 %v773, %v777
  %v782 = vsub.f32 %v774, %v778
  %v783 = vsub.f32 %v775, %v779
  %v784 = vsub.f32 %v776, %v780
  %786 = vset.pattern.permute.xlu0 0
  %787 = vperm.xlu0 %786, %v769
  %v788 = vpop.permute.xlu0 %787
  %791 = vset.pattern.permute.xlu0 0
  %792 = vperm.xlu0 %791, %v770
  %v793 = vpop.permute.xlu0 %792
  %796 = vset.pattern.permute.xlu0 0
  %797 = vperm.xlu0 %796, %v771
  %v798 = vpop.permute.xlu0 %797
  %801 = vset.pattern.permute.xlu0 0
  %802 = vperm.xlu0 %801, %v772
  %v803 = vpop.permute.xlu0 %802
  %v805 = vmul.f32 %v687, %v788
  %v806 = vmul.f32 %v689, %v788
  %v807 = vmul.f32 %v691, %v793
  %v808 = vmul.f32 %v693, %v793
  %v809 = vmul.f32 %v697, %v798
  %v810 = vmul.f32 %v699, %v798
  %v811 = vmul.f32 %v701, %v803
  %v812 = vmul.f32 %v703, %v803
  %814 = vset.pattern.permute.xlu0 0
  %815 = vperm.xlu0 %814, %v781
  %v816 = vpop.permute.xlu0 %815
  %819 = vset.pattern.permute.xlu0 0
  %820 = vperm.xlu0 %819, %v782
  %v821 = vpop.permute.xlu0 %820
  %824 = vset.pattern.permute.xlu0 0
  %825 = vperm.xlu0 %824, %v783
  %v826 = vpop.permute.xlu0 %825
  %829 = vset.pattern.permute.xlu0 0
  %830 = vperm.xlu0 %829, %v784
  %v831 = vpop.permute.xlu0 %830
  %v833 = vadd.f32 %v805, %v816
  %v834 = vadd.f32 %v806, %v816
  %v835 = vadd.f32 %v807, %v821
  %v836 = vadd.f32 %v808, %v821
  %v837 = vadd.f32 %v809, %v826
  %v838 = vadd.f32 %v810, %v826
  %v839 = vadd.f32 %v811, %v831
  %v840 = vadd.f32 %v812, %v831
  %vm841 = vcmp.gt.f32.partialorder %v833, 0.0
  %vm842 = vcmp.gt.f32.partialorder %v834, 0.0
  %vm843 = vcmp.gt.f32.partialorder %v835, 0.0
  %vm844 = vcmp.gt.f32.partialorder %v836, 0.0
  %vm845 = vcmp.gt.f32.partialorder %v837, 0.0
  %vm846 = vcmp.gt.f32.partialorder %v838, 0.0
  %vm847 = vcmp.gt.f32.partialorder %v839, 0.0
  %vm848 = vcmp.gt.f32.partialorder %v840, 0.0
  %v849 = vmin.f32 %v833, 0.0
  %v850 = vmin.f32 %v834, 0.0
  %v851 = vmin.f32 %v835, 0.0
  %v852 = vmin.f32 %v836, 0.0
  %v853 = vmin.f32 %v837, 0.0
  %v854 = vmin.f32 %v838, 0.0
  %v855 = vmin.f32 %v839, 0.0
  %v856 = vmin.f32 %v840, 0.0
  %v857 = vmul.f32 %v849, 1.442695
  %v858 = vpow.pop %v857
  %v859 = vmul.f32 %v850, 1.442695
  %v860 = vpow.pop %v859
  %v861 = vmul.f32 %v851, 1.442695
  %v862 = vpow.pop %v861
  %v863 = vmul.f32 %v852, 1.442695
  %v864 = vpow.pop %v863
  %v865 = vmul.f32 %v853, 1.442695
  %v866 = vpow.pop %v865
  %v867 = vmul.f32 %v854, 1.442695
  %v868 = vpow.pop %v867
  %v869 = vmul.f32 %v855, 1.442695
  %v870 = vpow.pop %v869
  %v871 = vmul.f32 %v856, 1.442695
  %v872 = vpow.pop %v871
  %v873 = vsub.f32 %v858, 1.0
  %v874 = vsub.f32 %v860, 1.0
  %v875 = vsub.f32 %v862, 1.0
  %v876 = vsub.f32 %v864, 1.0
  %v877 = vsub.f32 %v866, 1.0
  %v878 = vsub.f32 %v868, 1.0
  %v879 = vsub.f32 %v870, 1.0
  %v880 = vsub.f32 %v872, 1.0
  %v881 = vsel %vm841, %v833, %v873
  %v882 = vsel %vm842, %v834, %v874
  %v883 = vsel %vm843, %v835, %v875
  %v884 = vsel %vm844, %v836, %v876
  %v885 = vsel %vm845, %v837, %v877
  %v886 = vsel %vm846, %v838, %v878
  %v887 = vsel %vm847, %v839, %v879
  %v888 = vsel %vm848, %v840, %v880
  %s889 = scalar_lea.vmem %s14, 32
  %v890 = vld [vmem:[%s889] sm:$0xff]
  %v891 = vld [vmem:[%s889 + $0x8] sm:$0xff]
  %v892 = vld [vmem:[%s889 + $0x10] sm:$0xff]
  %v893 = vld [vmem:[%s889 + $0x18] sm:$0xff]
  %895 = vset.pattern.permute.xlu0 0
  %896 = vperm.xlu0 %895, %v890
  %v897 = vpop.permute.xlu0 %896
  %900 = vset.pattern.permute.xlu0 0
  %901 = vperm.xlu0 %900, %v891
  %v902 = vpop.permute.xlu0 %901
  %905 = vset.pattern.permute.xlu0 0
  %906 = vperm.xlu0 %905, %v892
  %v907 = vpop.permute.xlu0 %906
  %910 = vset.pattern.permute.xlu0 0
  %911 = vperm.xlu0 %910, %v893
  %v912 = vpop.permute.xlu0 %911
  %v914 = vmul.f32 %v897, %v881
  %v915 = vmul.f32 %v897, %v882
  %v916 = vmul.f32 %v902, %v883
  %v917 = vmul.f32 %v902, %v884
  %v918 = vmul.f32 %v907, %v885
  %v919 = vmul.f32 %v907, %v886
  %v920 = vmul.f32 %v912, %v887
  %v921 = vmul.f32 %v912, %v888
  %922 = vrot.lane.b32.xlu0 %v881, 1
  %v923 = vpop.permute.xlu0 %922
  %924 = vrot.lane.b32.xlu0 %v883, 1
  %v925 = vpop.permute.xlu0 %924
  %926 = vrot.lane.b32.xlu0 %v885, 1
  %v927 = vpop.permute.xlu0 %926
  %928 = vrot.lane.b32.xlu0 %v887, 1
  %v929 = vpop.permute.xlu0 %928
  %930 = vrot.lane.b32.xlu0 %v882, 1
  %v931 = vpop.permute.xlu0 %930
  %932 = vrot.lane.b32.xlu0 %v884, 1
  %v933 = vpop.permute.xlu0 %932
  %934 = vrot.lane.b32.xlu0 %v886, 1
  %v935 = vpop.permute.xlu0 %934
  %936 = vrot.lane.b32.xlu0 %v888, 1
  %v937 = vpop.permute.xlu0 %936
  %v938 = vsel %vm352, %v923, %v931
  %v939 = vsel %vm352, %v925, %v933
  %v940 = vsel %vm352, %v927, %v935
  %v941 = vsel %vm352, %v929, %v937
  %v942 = vsel %vm352, %v931, %v923
  %v943 = vsel %vm352, %v933, %v925
  %v944 = vsel %vm352, %v935, %v927
  %v945 = vsel %vm352, %v937, %v929
  %v946 = vld [vmem:[%s14] sm:$0xff]
  %v947 = vld [vmem:[%s14 + $0x8] sm:$0xff]
  %v948 = vld [vmem:[%s14 + $0x10] sm:$0xff]
  %v949 = vld [vmem:[%s14 + $0x18] sm:$0xff]
  %v950 = vsel %vm369, %v942, 0.0
  %v951 = vsel %vm370, %v938, 0.0
  %v952 = vsel %vm369, %v943, 0.0
  %v953 = vsel %vm370, %v939, 0.0
  %v954 = vsel %vm369, %v944, 0.0
  %v955 = vsel %vm370, %v940, 0.0
  %v956 = vsel %vm369, %v945, 0.0
  %v957 = vsel %vm370, %v941, 0.0
  %959 = vset.pattern.permute.xlu0 0
  %960 = vperm.xlu0 %959, %v946
  %v961 = vpop.permute.xlu0 %960
  %964 = vset.pattern.permute.xlu0 0
  %965 = vperm.xlu0 %964, %v947
  %v966 = vpop.permute.xlu0 %965
  %969 = vset.pattern.permute.xlu0 0
  %970 = vperm.xlu0 %969, %v948
  %v971 = vpop.permute.xlu0 %970
  %974 = vset.pattern.permute.xlu0 0
  %975 = vperm.xlu0 %974, %v949
  %v976 = vpop.permute.xlu0 %975
  %v978 = vmul.f32 %v961, %v950
  %v979 = vmul.f32 %v961, %v951
  %v980 = vmul.f32 %v966, %v952
  %v981 = vmul.f32 %v966, %v953
  %v982 = vmul.f32 %v971, %v954
  %v983 = vmul.f32 %v971, %v955
  %v984 = vmul.f32 %v976, %v956
  %v985 = vmul.f32 %v976, %v957
  %v986 = vadd.f32 %v914, %v978
  %v987 = vadd.f32 %v915, %v979
  %v988 = vadd.f32 %v916, %v980
  %v989 = vadd.f32 %v917, %v981
  %v990 = vadd.f32 %v918, %v982
  %v991 = vadd.f32 %v919, %v983
  %v992 = vadd.f32 %v920, %v984
  %v993 = vadd.f32 %v921, %v985
  %994 = vrot.lane.b32.xlu0 %v881, 127
  %v995 = vpop.permute.xlu0 %994
  %996 = vrot.lane.b32.xlu0 %v883, 127
  %v997 = vpop.permute.xlu0 %996
  %998 = vrot.lane.b32.xlu0 %v885, 127
  %v999 = vpop.permute.xlu0 %998
  %1000 = vrot.lane.b32.xlu0 %v887, 127
  %v1001 = vpop.permute.xlu0 %1000
  %1002 = vrot.lane.b32.xlu0 %v882, 127
  %v1003 = vpop.permute.xlu0 %1002
  %1004 = vrot.lane.b32.xlu0 %v884, 127
  %v1005 = vpop.permute.xlu0 %1004
  %1006 = vrot.lane.b32.xlu0 %v886, 127
  %v1007 = vpop.permute.xlu0 %1006
  %1008 = vrot.lane.b32.xlu0 %v888, 127
  %v1009 = vpop.permute.xlu0 %1008
  %v1010 = vsel %vm401, %v995, %v1003
  %v1011 = vsel %vm401, %v997, %v1005
  %v1012 = vsel %vm401, %v999, %v1007
  %v1013 = vsel %vm401, %v1001, %v1009
  %v1014 = vsel %vm401, %v1003, %v995
  %v1015 = vsel %vm401, %v1005, %v997
  %v1016 = vsel %vm401, %v1007, %v999
  %v1017 = vsel %vm401, %v1009, %v1001
  %s1018 = scalar_lea.vmem %s14, 64
  %v1019 = vld [vmem:[%s1018] sm:$0xff]
  %v1020 = vld [vmem:[%s1018 + $0x8] sm:$0xff]
  %v1021 = vld [vmem:[%s1018 + $0x10] sm:$0xff]
  %v1022 = vld [vmem:[%s1018 + $0x18] sm:$0xff]
  %v1023 = vsel %vm419, %v1010, 0.0
  %v1024 = vsel %vm420, %v1014, 0.0
  %v1025 = vsel %vm419, %v1011, 0.0
  %v1026 = vsel %vm420, %v1015, 0.0
  %v1027 = vsel %vm419, %v1012, 0.0
  %v1028 = vsel %vm420, %v1016, 0.0
  %v1029 = vsel %vm419, %v1013, 0.0
  %v1030 = vsel %vm420, %v1017, 0.0
  %1032 = vset.pattern.permute.xlu0 0
  %1033 = vperm.xlu0 %1032, %v1019
  %v1034 = vpop.permute.xlu0 %1033
  %1037 = vset.pattern.permute.xlu0 0
  %1038 = vperm.xlu0 %1037, %v1020
  %v1039 = vpop.permute.xlu0 %1038
  %1042 = vset.pattern.permute.xlu0 0
  %1043 = vperm.xlu0 %1042, %v1021
  %v1044 = vpop.permute.xlu0 %1043
  %1047 = vset.pattern.permute.xlu0 0
  %1048 = vperm.xlu0 %1047, %v1022
  %v1049 = vpop.permute.xlu0 %1048
  %v1051 = vmul.f32 %v1034, %v1023
  %v1052 = vmul.f32 %v1034, %v1024
  %v1053 = vmul.f32 %v1039, %v1025
  %v1054 = vmul.f32 %v1039, %v1026
  %v1055 = vmul.f32 %v1044, %v1027
  %v1056 = vmul.f32 %v1044, %v1028
  %v1057 = vmul.f32 %v1049, %v1029
  %v1058 = vmul.f32 %v1049, %v1030
  %v1059 = vadd.f32 %v986, %v1051
  %v1060 = vadd.f32 %v987, %v1052
  %v1061 = vadd.f32 %v988, %v1053
  %v1062 = vadd.f32 %v989, %v1054
  %v1063 = vadd.f32 %v990, %v1055
  %v1064 = vadd.f32 %v991, %v1056
  %v1065 = vadd.f32 %v992, %v1057
  %v1066 = vadd.f32 %v993, %v1058
  %v1067 = vld [vmem:[%s15] sm:$0xff]
  %v1068 = vld [vmem:[%s15 + $0x8] sm:$0xff]
  %v1069 = vld [vmem:[%s15 + $0x10] sm:$0xff]
  %v1070 = vld [vmem:[%s15 + $0x18] sm:$0xff]
  %1072 = vset.pattern.permute.xlu0 0
  %1073 = vperm.xlu0 %1072, %v1067
  %v1074 = vpop.permute.xlu0 %1073
  %1077 = vset.pattern.permute.xlu0 0
  %1078 = vperm.xlu0 %1077, %v1068
  %v1079 = vpop.permute.xlu0 %1078
  %1082 = vset.pattern.permute.xlu0 0
  %1083 = vperm.xlu0 %1082, %v1069
  %v1084 = vpop.permute.xlu0 %1083
  %1087 = vset.pattern.permute.xlu0 0
  %1088 = vperm.xlu0 %1087, %v1070
  %v1089 = vpop.permute.xlu0 %1088
  %v1091 = vadd.f32 %v1059, %v1074
  %v1092 = vadd.f32 %v1060, %v1074
  %v1093 = vadd.f32 %v1061, %v1079
  %v1094 = vadd.f32 %v1062, %v1079
  %v1095 = vadd.f32 %v1063, %v1084
  %v1096 = vadd.f32 %v1064, %v1084
  %v1097 = vadd.f32 %v1065, %v1089
  %v1098 = vadd.f32 %v1066, %v1089
  %v1099 = vadd.f32 %v1091, %v1092
  %1100 = vadd.xlane.f32.xlu0 %v1099
  %v1101 = vpop.xlane.xlu0 %1100
  %v1102 = vadd.f32 %v1093, %v1094
  %1103 = vadd.xlane.f32.xlu0 %v1102
  %v1104 = vpop.xlane.xlu0 %1103
  %v1105 = vadd.f32 %v1095, %v1096
  %1106 = vadd.xlane.f32.xlu0 %v1105
  %v1107 = vpop.xlane.xlu0 %1106
  %v1108 = vadd.f32 %v1097, %v1098
  %1109 = vadd.xlane.f32.xlu0 %v1108
  %v1110 = vpop.xlane.xlu0 %1109
  %v1111 = vmul.f32 %v1091, %v1091
  %v1112 = vmul.f32 %v1092, %v1092
  %v1113 = vmul.f32 %v1093, %v1093
  %v1114 = vmul.f32 %v1094, %v1094
  %v1115 = vmul.f32 %v1095, %v1095
  %v1116 = vmul.f32 %v1096, %v1096
  %v1117 = vmul.f32 %v1097, %v1097
  %v1118 = vmul.f32 %v1098, %v1098
  %v1119 = vadd.f32 %v1111, %v1112
  %1120 = vadd.xlane.f32.xlu0 %v1119
  %v1121 = vpop.xlane.xlu0 %1120
  %v1122 = vadd.f32 %v1113, %v1114
  %1123 = vadd.xlane.f32.xlu0 %v1122
  %v1124 = vpop.xlane.xlu0 %1123
  %v1125 = vadd.f32 %v1115, %v1116
  %1126 = vadd.xlane.f32.xlu0 %v1125
  %v1127 = vpop.xlane.xlu0 %1126
  %v1128 = vadd.f32 %v1117, %v1118
  %1129 = vadd.xlane.f32.xlu0 %v1128
  %v1130 = vpop.xlane.xlu0 %1129
  %v1131 = vmul.f32 %v1101, 0.00390625
  %v1132 = vmul.f32 %v1104, 0.00390625
  %v1133 = vmul.f32 %v1107, 0.00390625
  %v1134 = vmul.f32 %v1110, 0.00390625
  %v1135 = vmul.f32 %v1121, 0.00390625
  %v1136 = vmul.f32 %v1124, 0.00390625
  %v1137 = vmul.f32 %v1127, 0.00390625
  %v1138 = vmul.f32 %v1130, 0.00390625
  %v1139 = vmul.f32 %v1131, %v1131
  %v1140 = vmul.f32 %v1132, %v1132
  %v1141 = vmul.f32 %v1133, %v1133
  %v1142 = vmul.f32 %v1134, %v1134
  %v1143 = vsub.f32 %v1135, %v1139
  %v1144 = vsub.f32 %v1136, %v1140
  %v1145 = vsub.f32 %v1137, %v1141
  %v1146 = vsub.f32 %v1138, %v1142
  %v1147 = vmax.f32 %v1143, 0.0
  %v1148 = vmax.f32 %v1144, 0.0
  %v1149 = vmax.f32 %v1145, 0.0
  %v1150 = vmax.f32 %v1146, 0.0
  %v1151 = vld [vmem:[%s16] sm:$0xff]
  %v1152 = vld [vmem:[%s16 + $0x8] sm:$0xff]
  %v1153 = vld [vmem:[%s16 + $0x10] sm:$0xff]
  %v1154 = vld [vmem:[%s16 + $0x18] sm:$0xff]
  %v1155 = vadd.f32 %v1147, 1e-05
  %v1156 = vadd.f32 %v1148, 1e-05
  %v1157 = vadd.f32 %v1149, 1e-05
  %v1158 = vadd.f32 %v1150, 1e-05
  %v1159 = vrsqrt.pop %v1155
  %v1160 = vrsqrt.pop %v1156
  %v1161 = vrsqrt.pop %v1157
  %v1162 = vrsqrt.pop %v1158
  %v1163 = vmul.f32 %v1151, %v1159
  %v1164 = vmul.f32 %v1152, %v1160
  %v1165 = vmul.f32 %v1153, %v1161
  %v1166 = vmul.f32 %v1154, %v1162
  %v1167 = vld [vmem:[%s17] sm:$0xff]
  %v1168 = vld [vmem:[%s17 + $0x8] sm:$0xff]
  %v1169 = vld [vmem:[%s17 + $0x10] sm:$0xff]
  %v1170 = vld [vmem:[%s17 + $0x18] sm:$0xff]
  %v1171 = vmul.f32 %v1131, %v1163
  %v1172 = vmul.f32 %v1132, %v1164
  %v1173 = vmul.f32 %v1133, %v1165
  %v1174 = vmul.f32 %v1134, %v1166
  %v1175 = vsub.f32 %v1167, %v1171
  %v1176 = vsub.f32 %v1168, %v1172
  %v1177 = vsub.f32 %v1169, %v1173
  %v1178 = vsub.f32 %v1170, %v1174
  %v1179 = vld [vmem:[%s18] sm:$0xff]
  %v1180 = vld [vmem:[%s18 + $0x8] sm:$0xff]
  %v1181 = vld [vmem:[%s18 + $0x10] sm:$0xff]
  %v1182 = vld [vmem:[%s18 + $0x18] sm:$0xff]
  %v1183 = vld [vmem:[%s18 + $0x20] sm:$0xff]
  %v1184 = vld [vmem:[%s18 + $0x28] sm:$0xff]
  %v1185 = vld [vmem:[%s18 + $0x30] sm:$0xff]
  %v1186 = vld [vmem:[%s18 + $0x38] sm:$0xff]
  %v1187 = vld [vmem:[%s19] sm:$0xff]
  %v1188 = vld [vmem:[%s19 + $0x8] sm:$0xff]
  %v1189 = vld [vmem:[%s19 + $0x10] sm:$0xff]
  %v1190 = vld [vmem:[%s19 + $0x18] sm:$0xff]
  %v1191 = vld [vmem:[%s19 + $0x20] sm:$0xff]
  %v1192 = vld [vmem:[%s19 + $0x28] sm:$0xff]
  %v1193 = vld [vmem:[%s19 + $0x30] sm:$0xff]
  %v1194 = vld [vmem:[%s19 + $0x38] sm:$0xff]
  %v1196 = vsel %vm95, %v1179, 0
  %v1199 = vsel %vm95, %v1180, 0
  %v1202 = vsel %vm95, %v1181, 0
  %v1205 = vsel %vm95, %v1182, 0
  %v1208 = vsel %vm95, %v1183, 0
  %v1211 = vsel %vm95, %v1184, 0
  %v1214 = vsel %vm95, %v1185, 0
  %v1217 = vsel %vm95, %v1186, 0
  %1219 = vmatprep.subr.mxu0 0.0
  %1220 = vmatpush1.msra.mxu0 %v1175
  %1221 = vmatprep.subr.mxu0 0.0
  %1222 = vmatpush1.msra.mxu0 %v1176
  %1223 = vmatprep.subr.mxu0 0.0
  %1224 = vmatpush1.msra.mxu0 %v1177
  %1225 = vmatprep.subr.mxu0 0.0
  %1226 = vmatpush1.msra.mxu0 %v1178
  %1227 = vmatprep.subr.mxu0 0.0
  %1228 = vmatpush1.msra.mxu0 0.0
  %1229 = vmatprep.subr.mxu0 0.0
  %1230 = vmatpush1.msra.mxu0 0.0
  %1231 = vmatprep.subr.mxu0 0.0
  %1232 = vmatpush1.msra.mxu0 0.0
  %1233 = vmatprep.subr.mxu0 0.0
  %1234 = vmatpush1.msra.mxu0 0.0
  %1235 = vmatprep.subr.mxu0 0.0
  %1236 = vmatpush1.msra.mxu0 0.0
  %1237 = vmatprep.subr.mxu0 0.0
  %1238 = vmatpush1.msra.mxu0 0.0
  %1239 = vmatprep.subr.mxu0 0.0
  %1240 = vmatpush1.msra.mxu0 0.0
  %1241 = vmatprep.subr.mxu0 0.0
  %1242 = vmatpush1.msra.mxu0 0.0
  %1243 = vmatprep.subr.mxu0 0.0
  %1244 = vmatpush1.msra.mxu0 0.0
  %1245 = vmatprep.subr.mxu0 0.0
  %1246 = vmatpush1.msra.mxu0 0.0
  %1247 = vmatprep.subr.mxu0 0.0
  %1248 = vmatpush1.msra.mxu0 0.0
  %1249 = vmatprep.subr.mxu0 0.0
  %1250 = vmatpush1.msra.mxu0 0.0
  %1251 = vmatprep.subr.mxu0 0.0
  %1252 = vmatpush1.msra.mxu0 0.0
  %1253 = vmatprep.subr.mxu0 0.0
  %1254 = vmatpush1.msra.mxu0 0.0
  %1255 = vmatprep.subr.mxu0 0.0
  %1256 = vmatpush1.msra.mxu0 0.0
  %1257 = vmatprep.subr.mxu0 0.0
  %1258 = vmatpush1.msra.mxu0 0.0
  %1259 = vmatprep.subr.mxu0 0.0
  %1260 = vmatpush1.msra.mxu0 0.0
  %1261 = vmatprep.subr.mxu0 0.0
  %1262 = vmatpush1.msra.mxu0 0.0
  %1263 = vmatprep.subr.mxu0 0.0
  %1264 = vmatpush1.msra.mxu0 0.0
  %1265 = vmatprep.subr.mxu0 0.0
  %1266 = vmatpush1.msra.mxu0 0.0
  %1267 = vmatprep.subr.mxu0 0.0
  %1268 = vmatpush1.msra.mxu0 0.0
  %1269 = vmatprep.subr.mxu0 0.0
  %1270 = vmatpush1.msra.mxu0 0.0
  %1271 = vmatprep.subr.mxu0 0.0
  %1272 = vmatpush1.msra.mxu0 0.0
  %1273 = vmatprep.subr.mxu0 0.0
  %1274 = vmatpush1.msra.mxu0 0.0
  %1275 = vmatprep.subr.mxu0 0.0
  %1276 = vmatpush1.msra.mxu0 0.0
  %1277 = vmatprep.subr.mxu0 0.0
  %1278 = vmatpush1.msra.mxu0 0.0
  %1279 = vmatprep.subr.mxu0 0.0
  %1280 = vmatpush1.msra.mxu0 0.0
  %1281 = vmatprep.subr.mxu0 0.0
  %1282 = vmatpush1.msra.mxu0 0.0
  %1283 = vmatprep.mubr.f32.mxu0 0.0
  %1284 = vmatmul.mubr.f32.gmra.mrb[0].mxu0 %v1196
  %v1285 = vpop.f32.mrb[0].mxu0
  %v1286 = vadd.f32 0.0, %v1285
  %v1287 = vpop.f32.mrb[0].mxu0
  %1288 = vmatprep.mubr.f32.mxu0 0.0
  %1289 = vmatmul.mubr.f32.gmra.mrb[0].mxu0 %v1199
  %v1290 = vpop.f32.mrb[0].mxu0
  %v1291 = vadd.f32 0.0, %v1290
  %v1292 = vpop.f32.mrb[0].mxu0
  %1293 = vmatprep.mubr.f32.mxu0 0.0
  %1294 = vmatmul.mubr.f32.gmra.mrb[0].mxu0 %v1202
  %v1295 = vpop.f32.mrb[0].mxu0
  %v1296 = vadd.f32 0.0, %v1295
  %v1297 = vpop.f32.mrb[0].mxu0
  %1298 = vmatprep.mubr.f32.mxu0 0.0
  %1299 = vmatmul.mubr.f32.gmra.mrb[0].mxu0 %v1205
  %v1300 = vpop.f32.mrb[0].mxu0
  %v1301 = vadd.f32 0.0, %v1300
  %v1302 = vpop.f32.mrb[0].mxu0
  %1303 = vmatprep.mubr.f32.mxu0 0.0
  %1304 = vmatmul.mubr.f32.gmra.mrb[0].mxu0 %v1208
  %v1305 = vpop.f32.mrb[0].mxu0
  %v1306 = vadd.f32 0.0, %v1305
  %v1307 = vpop.f32.mrb[0].mxu0
  %1308 = vmatprep.mubr.f32.mxu0 0.0
  %1309 = vmatmul.mubr.f32.gmra.mrb[0].mxu0 %v1211
  %v1310 = vpop.f32.mrb[0].mxu0
  %v1311 = vadd.f32 0.0, %v1310
  %v1312 = vpop.f32.mrb[0].mxu0
  %1313 = vmatprep.mubr.f32.mxu0 0.0
  %1314 = vmatmul.mubr.f32.gmra.mrb[0].mxu0 %v1214
  %v1315 = vpop.f32.mrb[0].mxu0
  %v1316 = vadd.f32 0.0, %v1315
  %v1317 = vpop.f32.mrb[0].mxu0
  %1318 = vmatprep.mubr.f32.mxu0 0.0
  %1319 = vmatmul.mubr.f32.gmra.mrb[0].mxu0 %v1217
  %v1320 = vpop.f32.mrb[0].mxu0
  %v1321 = vadd.f32 0.0, %v1320
  %v1322 = vpop.f32.mrb[0].mxu0
  %1323 = vdwg.mxu0
  %v1324 = vadd.f32 %v1187, %v1286
  %v1325 = vadd.f32 %v1188, %v1291
  %v1326 = vadd.f32 %v1189, %v1296
  %v1327 = vadd.f32 %v1190, %v1301
  %v1328 = vadd.f32 %v1191, %v1306
  %v1329 = vadd.f32 %v1192, %v1311
  %v1330 = vadd.f32 %v1193, %v1316
  %v1331 = vadd.f32 %v1194, %v1321
  %1333 = vset.pattern.permute.xlu0 0
  %1334 = vperm.xlu0 %1333, %v1163
  %v1335 = vpop.permute.xlu0 %1334
  %1338 = vset.pattern.permute.xlu0 0
  %1339 = vperm.xlu0 %1338, %v1164
  %v1340 = vpop.permute.xlu0 %1339
  %1343 = vset.pattern.permute.xlu0 0
  %1344 = vperm.xlu0 %1343, %v1165
  %v1345 = vpop.permute.xlu0 %1344
  %1348 = vset.pattern.permute.xlu0 0
  %1349 = vperm.xlu0 %1348, %v1166
  %v1350 = vpop.permute.xlu0 %1349
  %v1352 = vmul.f32 %v1091, %v1335
  %v1353 = vmul.f32 %v1092, %v1335
  %v1354 = vmul.f32 %v1093, %v1340
  %v1355 = vmul.f32 %v1094, %v1340
  %v1356 = vmul.f32 %v1095, %v1345
  %v1357 = vmul.f32 %v1096, %v1345
  %v1358 = vmul.f32 %v1097, %v1350
  %v1359 = vmul.f32 %v1098, %v1350
  %v1360 = vpack.c.bf16 %v1354, %v1352
  %v1361 = vpack.c.bf16 %v1355, %v1353
  %v1362 = vpack.c.bf16 %v1358, %v1356
  %v1363 = vpack.c.bf16 %v1359, %v1357
  %v1364 = vpack.c.bf16 %v1180, %v1179
  %v1365 = vpack.c.bf16 %v1182, %v1181
  %v1366 = vpack.c.bf16 %v1184, %v1183
  %v1367 = vpack.c.bf16 %v1186, %v1185
  %1369 = vset.pattern.permute.xlu0 0
  %1370 = vperm.xlu0 %1369, %v1324
  %v1371 = vpop.permute.xlu0 %1370
  %1374 = vset.pattern.permute.xlu0 0
  %1375 = vperm.xlu0 %1374, %v1325
  %v1376 = vpop.permute.xlu0 %1375
  %1379 = vset.pattern.permute.xlu0 0
  %1380 = vperm.xlu0 %1379, %v1326
  %v1381 = vpop.permute.xlu0 %1380
  %1384 = vset.pattern.permute.xlu0 0
  %1385 = vperm.xlu0 %1384, %v1327
  %v1386 = vpop.permute.xlu0 %1385
  %1389 = vset.pattern.permute.xlu0 0
  %1390 = vperm.xlu0 %1389, %v1328
  %v1391 = vpop.permute.xlu0 %1390
  %1394 = vset.pattern.permute.xlu0 0
  %1395 = vperm.xlu0 %1394, %v1329
  %v1396 = vpop.permute.xlu0 %1395
  %1399 = vset.pattern.permute.xlu0 0
  %1400 = vperm.xlu0 %1399, %v1330
  %v1401 = vpop.permute.xlu0 %1400
  %1404 = vset.pattern.permute.xlu0 0
  %1405 = vperm.xlu0 %1404, %v1331
  %v1406 = vpop.permute.xlu0 %1405
  %v1409 = vsel %vm95, %v1364, 0
  %v1412 = vsel %vm95, %v1365, 0
  %v1415 = vsel %vm95, %v1366, 0
  %v1418 = vsel %vm95, %v1367, 0
  %1420 = vmatprep.subr.bf16.mxu0 %v1361
  %1421 = vmatpush1.bf16.msra.mxu0 %v1360
  %1422 = vmatprep.subr.bf16.mxu0 %v1363
  %1423 = vmatpush1.bf16.msra.mxu0 %v1362
  %1424 = vmatprep.subr.bf16.mxu0 0
  %1425 = vmatpush1.bf16.msra.mxu0 0
  %1426 = vmatprep.subr.bf16.mxu0 0
  %1427 = vmatpush1.bf16.msra.mxu0 0
  %1428 = vmatprep.subr.bf16.mxu0 0
  %1429 = vmatpush1.bf16.msra.mxu0 0
  %1430 = vmatprep.subr.bf16.mxu0 0
  %1431 = vmatpush1.bf16.msra.mxu0 0
  %1432 = vmatprep.subr.bf16.mxu0 0
  %1433 = vmatpush1.bf16.msra.mxu0 0
  %1434 = vmatprep.subr.bf16.mxu0 0
  %1435 = vmatpush1.bf16.msra.mxu0 0
  %1436 = vmatprep.subr.bf16.mxu0 0
  %1437 = vmatpush1.bf16.msra.mxu0 0
  %1438 = vmatprep.subr.bf16.mxu0 0
  %1439 = vmatpush1.bf16.msra.mxu0 0
  %1440 = vmatprep.subr.bf16.mxu0 0
  %1441 = vmatpush1.bf16.msra.mxu0 0
  %1442 = vmatprep.subr.bf16.mxu0 0
  %1443 = vmatpush1.bf16.msra.mxu0 0
  %1444 = vmatprep.subr.bf16.mxu0 0
  %1445 = vmatpush1.bf16.msra.mxu0 0
  %1446 = vmatprep.subr.bf16.mxu0 0
  %1447 = vmatpush1.bf16.msra.mxu0 0
  %1448 = vmatprep.subr.bf16.mxu0 0
  %1449 = vmatpush1.bf16.msra.mxu0 0
  %1450 = vmatprep.subr.bf16.mxu0 0
  %1451 = vmatpush1.bf16.msra.mxu0 0
  %1452 = vmatprep.mubr.bf16.mxu0 0
  %1453 = vmatmul.mubr.bf16.gmra.mrb[0].mxu0 %v1409
  %v1454 = vpop.f32.mrb[0].mxu0
  %v1455 = vadd.f32 %v1371, %v1454
  %v1456 = vpop.f32.mrb[0].mxu0
  %v1457 = vadd.f32 %v1371, %v1456
  %v1458 = vpop.f32.mrb[0].mxu0
  %v1459 = vadd.f32 %v1376, %v1458
  %v1460 = vpop.f32.mrb[0].mxu0
  %v1461 = vadd.f32 %v1376, %v1460
  %1462 = vmatprep.mubr.bf16.mxu0 0
  %1463 = vmatmul.mubr.bf16.gmra.mrb[0].mxu0 %v1412
  %v1464 = vpop.f32.mrb[0].mxu0
  %v1465 = vadd.f32 %v1381, %v1464
  %v1466 = vpop.f32.mrb[0].mxu0
  %v1467 = vadd.f32 %v1381, %v1466
  %v1468 = vpop.f32.mrb[0].mxu0
  %v1469 = vadd.f32 %v1386, %v1468
  %v1470 = vpop.f32.mrb[0].mxu0
  %v1471 = vadd.f32 %v1386, %v1470
  %1472 = vmatprep.mubr.bf16.mxu0 0
  %1473 = vmatmul.mubr.bf16.gmra.mrb[0].mxu0 %v1415
  %v1474 = vpop.f32.mrb[0].mxu0
  %v1475 = vadd.f32 %v1391, %v1474
  %v1476 = vpop.f32.mrb[0].mxu0
  %v1477 = vadd.f32 %v1391, %v1476
  %v1478 = vpop.f32.mrb[0].mxu0
  %v1479 = vadd.f32 %v1396, %v1478
  %v1480 = vpop.f32.mrb[0].mxu0
  %v1481 = vadd.f32 %v1396, %v1480
  %1482 = vmatprep.mubr.bf16.mxu0 0
  %1483 = vmatmul.mubr.bf16.gmra.mrb[0].mxu0 %v1418
  %v1484 = vpop.f32.mrb[0].mxu0
  %v1485 = vadd.f32 %v1401, %v1484
  %v1486 = vpop.f32.mrb[0].mxu0
  %v1487 = vadd.f32 %v1401, %v1486
  %v1488 = vpop.f32.mrb[0].mxu0
  %v1489 = vadd.f32 %v1406, %v1488
  %v1490 = vpop.f32.mrb[0].mxu0
  %v1491 = vadd.f32 %v1406, %v1490
  %1492 = vdwg.mxu0
  %v1493 = vadd.f32 %v1455, %v1457
  %1494 = vadd.xlane.f32.xlu0 %v1493
  %v1495 = vpop.xlane.xlu0 %1494
  %v1496 = vadd.f32 %v1459, %v1461
  %1497 = vadd.xlane.f32.xlu0 %v1496
  %v1498 = vpop.xlane.xlu0 %1497
  %v1499 = vadd.f32 %v1465, %v1467
  %1500 = vadd.xlane.f32.xlu0 %v1499
  %v1501 = vpop.xlane.xlu0 %1500
  %v1502 = vadd.f32 %v1469, %v1471
  %1503 = vadd.xlane.f32.xlu0 %v1502
  %v1504 = vpop.xlane.xlu0 %1503
  %v1505 = vadd.f32 %v1475, %v1477
  %1506 = vadd.xlane.f32.xlu0 %v1505
  %v1507 = vpop.xlane.xlu0 %1506
  %v1508 = vadd.f32 %v1479, %v1481
  %1509 = vadd.xlane.f32.xlu0 %v1508
  %v1510 = vpop.xlane.xlu0 %1509
  %v1511 = vadd.f32 %v1485, %v1487
  %1512 = vadd.xlane.f32.xlu0 %v1511
  %v1513 = vpop.xlane.xlu0 %1512
  %v1514 = vadd.f32 %v1489, %v1491
  %1515 = vadd.xlane.f32.xlu0 %v1514
  %v1516 = vpop.xlane.xlu0 %1515
  %v1517 = vmul.f32 %v1455, %v1455
  %v1518 = vmul.f32 %v1457, %v1457
  %v1519 = vmul.f32 %v1459, %v1459
  %v1520 = vmul.f32 %v1461, %v1461
  %v1521 = vmul.f32 %v1465, %v1465
  %v1522 = vmul.f32 %v1467, %v1467
  %v1523 = vmul.f32 %v1469, %v1469
  %v1524 = vmul.f32 %v1471, %v1471
  %v1525 = vmul.f32 %v1475, %v1475
  %v1526 = vmul.f32 %v1477, %v1477
  %v1527 = vmul.f32 %v1479, %v1479
  %v1528 = vmul.f32 %v1481, %v1481
  %v1529 = vmul.f32 %v1485, %v1485
  %v1530 = vmul.f32 %v1487, %v1487
  %v1531 = vmul.f32 %v1489, %v1489
  %v1532 = vmul.f32 %v1491, %v1491
  %v1533 = vadd.f32 %v1517, %v1518
  %1534 = vadd.xlane.f32.xlu0 %v1533
  %v1535 = vpop.xlane.xlu0 %1534
  %v1536 = vadd.f32 %v1519, %v1520
  %1537 = vadd.xlane.f32.xlu0 %v1536
  %v1538 = vpop.xlane.xlu0 %1537
  %v1539 = vadd.f32 %v1521, %v1522
  %1540 = vadd.xlane.f32.xlu0 %v1539
  %v1541 = vpop.xlane.xlu0 %1540
  %v1542 = vadd.f32 %v1523, %v1524
  %1543 = vadd.xlane.f32.xlu0 %v1542
  %v1544 = vpop.xlane.xlu0 %1543
  %v1545 = vadd.f32 %v1525, %v1526
  %1546 = vadd.xlane.f32.xlu0 %v1545
  %v1547 = vpop.xlane.xlu0 %1546
  %v1548 = vadd.f32 %v1527, %v1528
  %1549 = vadd.xlane.f32.xlu0 %v1548
  %v1550 = vpop.xlane.xlu0 %1549
  %v1551 = vadd.f32 %v1529, %v1530
  %1552 = vadd.xlane.f32.xlu0 %v1551
  %v1553 = vpop.xlane.xlu0 %1552
  %v1554 = vadd.f32 %v1531, %v1532
  %1555 = vadd.xlane.f32.xlu0 %v1554
  %v1556 = vpop.xlane.xlu0 %1555
  %v1557 = vmul.f32 %v1495, 0.00390625
  %v1558 = vmul.f32 %v1498, 0.00390625
  %v1559 = vmul.f32 %v1501, 0.00390625
  %v1560 = vmul.f32 %v1504, 0.00390625
  %v1561 = vmul.f32 %v1507, 0.00390625
  %v1562 = vmul.f32 %v1510, 0.00390625
  %v1563 = vmul.f32 %v1513, 0.00390625
  %v1564 = vmul.f32 %v1516, 0.00390625
  %v1565 = vmul.f32 %v1535, 0.00390625
  %v1566 = vmul.f32 %v1538, 0.00390625
  %v1567 = vmul.f32 %v1541, 0.00390625
  %v1568 = vmul.f32 %v1544, 0.00390625
  %v1569 = vmul.f32 %v1547, 0.00390625
  %v1570 = vmul.f32 %v1550, 0.00390625
  %v1571 = vmul.f32 %v1553, 0.00390625
  %v1572 = vmul.f32 %v1556, 0.00390625
  %v1573 = vmul.f32 %v1557, %v1557
  %v1574 = vmul.f32 %v1558, %v1558
  %v1575 = vmul.f32 %v1559, %v1559
  %v1576 = vmul.f32 %v1560, %v1560
  %v1577 = vmul.f32 %v1561, %v1561
  %v1578 = vmul.f32 %v1562, %v1562
  %v1579 = vmul.f32 %v1563, %v1563
  %v1580 = vmul.f32 %v1564, %v1564
  %v1581 = vsub.f32 %v1565, %v1573
  %v1582 = vsub.f32 %v1566, %v1574
  %v1583 = vsub.f32 %v1567, %v1575
  %v1584 = vsub.f32 %v1568, %v1576
  %v1585 = vsub.f32 %v1569, %v1577
  %v1586 = vsub.f32 %v1570, %v1578
  %v1587 = vsub.f32 %v1571, %v1579
  %v1588 = vsub.f32 %v1572, %v1580
  %v1589 = vmax.f32 %v1581, 0.0
  %v1590 = vmax.f32 %v1582, 0.0
  %v1591 = vmax.f32 %v1583, 0.0
  %v1592 = vmax.f32 %v1584, 0.0
  %v1593 = vmax.f32 %v1585, 0.0
  %v1594 = vmax.f32 %v1586, 0.0
  %v1595 = vmax.f32 %v1587, 0.0
  %v1596 = vmax.f32 %v1588, 0.0
  %v1597 = vld [vmem:[%s20] sm:$0xff]
  %v1598 = vld [vmem:[%s20 + $0x8] sm:$0xff]
  %v1599 = vld [vmem:[%s20 + $0x10] sm:$0xff]
  %v1600 = vld [vmem:[%s20 + $0x18] sm:$0xff]
  %v1601 = vld [vmem:[%s20 + $0x20] sm:$0xff]
  %v1602 = vld [vmem:[%s20 + $0x28] sm:$0xff]
  %v1603 = vld [vmem:[%s20 + $0x30] sm:$0xff]
  %v1604 = vld [vmem:[%s20 + $0x38] sm:$0xff]
  %v1605 = vadd.f32 %v1589, 1e-05
  %v1606 = vadd.f32 %v1590, 1e-05
  %v1607 = vadd.f32 %v1591, 1e-05
  %v1608 = vadd.f32 %v1592, 1e-05
  %v1609 = vadd.f32 %v1593, 1e-05
  %v1610 = vadd.f32 %v1594, 1e-05
  %v1611 = vadd.f32 %v1595, 1e-05
  %v1612 = vadd.f32 %v1596, 1e-05
  %v1613 = vrsqrt.pop %v1605
  %v1614 = vrsqrt.pop %v1606
  %v1615 = vrsqrt.pop %v1607
  %v1616 = vrsqrt.pop %v1608
  %v1617 = vrsqrt.pop %v1609
  %v1618 = vrsqrt.pop %v1610
  %v1619 = vrsqrt.pop %v1611
  %v1620 = vrsqrt.pop %v1612
  %v1621 = vmul.f32 %v1597, %v1613
  %v1622 = vmul.f32 %v1598, %v1614
  %v1623 = vmul.f32 %v1599, %v1615
  %v1624 = vmul.f32 %v1600, %v1616
  %v1625 = vmul.f32 %v1601, %v1617
  %v1626 = vmul.f32 %v1602, %v1618
  %v1627 = vmul.f32 %v1603, %v1619
  %v1628 = vmul.f32 %v1604, %v1620
  %v1629 = vld [vmem:[%s21] sm:$0xff]
  %v1630 = vld [vmem:[%s21 + $0x8] sm:$0xff]
  %v1631 = vld [vmem:[%s21 + $0x10] sm:$0xff]
  %v1632 = vld [vmem:[%s21 + $0x18] sm:$0xff]
  %v1633 = vld [vmem:[%s21 + $0x20] sm:$0xff]
  %v1634 = vld [vmem:[%s21 + $0x28] sm:$0xff]
  %v1635 = vld [vmem:[%s21 + $0x30] sm:$0xff]
  %v1636 = vld [vmem:[%s21 + $0x38] sm:$0xff]
  %v1637 = vmul.f32 %v1557, %v1621
  %v1638 = vmul.f32 %v1558, %v1622
  %v1639 = vmul.f32 %v1559, %v1623
  %v1640 = vmul.f32 %v1560, %v1624
  %v1641 = vmul.f32 %v1561, %v1625
  %v1642 = vmul.f32 %v1562, %v1626
  %v1643 = vmul.f32 %v1563, %v1627
  %v1644 = vmul.f32 %v1564, %v1628
  %v1645 = vsub.f32 %v1629, %v1637
  %v1646 = vsub.f32 %v1630, %v1638
  %v1647 = vsub.f32 %v1631, %v1639
  %v1648 = vsub.f32 %v1632, %v1640
  %v1649 = vsub.f32 %v1633, %v1641
  %v1650 = vsub.f32 %v1634, %v1642
  %v1651 = vsub.f32 %v1635, %v1643
  %v1652 = vsub.f32 %v1636, %v1644
  %1654 = vset.pattern.permute.xlu0 0
  %1655 = vperm.xlu0 %1654, %v1621
  %v1656 = vpop.permute.xlu0 %1655
  %1659 = vset.pattern.permute.xlu0 0
  %1660 = vperm.xlu0 %1659, %v1622
  %v1661 = vpop.permute.xlu0 %1660
  %1664 = vset.pattern.permute.xlu0 0
  %1665 = vperm.xlu0 %1664, %v1623
  %v1666 = vpop.permute.xlu0 %1665
  %1669 = vset.pattern.permute.xlu0 0
  %1670 = vperm.xlu0 %1669, %v1624
  %v1671 = vpop.permute.xlu0 %1670
  %1674 = vset.pattern.permute.xlu0 0
  %1675 = vperm.xlu0 %1674, %v1625
  %v1676 = vpop.permute.xlu0 %1675
  %1679 = vset.pattern.permute.xlu0 0
  %1680 = vperm.xlu0 %1679, %v1626
  %v1681 = vpop.permute.xlu0 %1680
  %1684 = vset.pattern.permute.xlu0 0
  %1685 = vperm.xlu0 %1684, %v1627
  %v1686 = vpop.permute.xlu0 %1685
  %1689 = vset.pattern.permute.xlu0 0
  %1690 = vperm.xlu0 %1689, %v1628
  %v1691 = vpop.permute.xlu0 %1690
  %v1693 = vmul.f32 %v1455, %v1656
  %v1694 = vmul.f32 %v1457, %v1656
  %v1695 = vmul.f32 %v1459, %v1661
  %v1696 = vmul.f32 %v1461, %v1661
  %v1697 = vmul.f32 %v1465, %v1666
  %v1698 = vmul.f32 %v1467, %v1666
  %v1699 = vmul.f32 %v1469, %v1671
  %v1700 = vmul.f32 %v1471, %v1671
  %v1701 = vmul.f32 %v1475, %v1676
  %v1702 = vmul.f32 %v1477, %v1676
  %v1703 = vmul.f32 %v1479, %v1681
  %v1704 = vmul.f32 %v1481, %v1681
  %v1705 = vmul.f32 %v1485, %v1686
  %v1706 = vmul.f32 %v1487, %v1686
  %v1707 = vmul.f32 %v1489, %v1691
  %v1708 = vmul.f32 %v1491, %v1691
  %1710 = vset.pattern.permute.xlu0 0
  %1711 = vperm.xlu0 %1710, %v1645
  %v1712 = vpop.permute.xlu0 %1711
  %1715 = vset.pattern.permute.xlu0 0
  %1716 = vperm.xlu0 %1715, %v1646
  %v1717 = vpop.permute.xlu0 %1716
  %1720 = vset.pattern.permute.xlu0 0
  %1721 = vperm.xlu0 %1720, %v1647
  %v1722 = vpop.permute.xlu0 %1721
  %1725 = vset.pattern.permute.xlu0 0
  %1726 = vperm.xlu0 %1725, %v1648
  %v1727 = vpop.permute.xlu0 %1726
  %1730 = vset.pattern.permute.xlu0 0
  %1731 = vperm.xlu0 %1730, %v1649
  %v1732 = vpop.permute.xlu0 %1731
  %1735 = vset.pattern.permute.xlu0 0
  %1736 = vperm.xlu0 %1735, %v1650
  %v1737 = vpop.permute.xlu0 %1736
  %1740 = vset.pattern.permute.xlu0 0
  %1741 = vperm.xlu0 %1740, %v1651
  %v1742 = vpop.permute.xlu0 %1741
  %1745 = vset.pattern.permute.xlu0 0
  %1746 = vperm.xlu0 %1745, %v1652
  %v1747 = vpop.permute.xlu0 %1746
  %v1749 = vadd.f32 %v1693, %v1712
  %v1750 = vadd.f32 %v1694, %v1712
  %v1751 = vadd.f32 %v1695, %v1717
  %v1752 = vadd.f32 %v1696, %v1717
  %v1753 = vadd.f32 %v1697, %v1722
  %v1754 = vadd.f32 %v1698, %v1722
  %v1755 = vadd.f32 %v1699, %v1727
  %v1756 = vadd.f32 %v1700, %v1727
  %v1757 = vadd.f32 %v1701, %v1732
  %v1758 = vadd.f32 %v1702, %v1732
  %v1759 = vadd.f32 %v1703, %v1737
  %v1760 = vadd.f32 %v1704, %v1737
  %v1761 = vadd.f32 %v1705, %v1742
  %v1762 = vadd.f32 %v1706, %v1742
  %v1763 = vadd.f32 %v1707, %v1747
  %v1764 = vadd.f32 %v1708, %v1747
  %1765 = vmax.xlane.f32.xlu0 %v1749
  %v1766 = vpop.xlane.xlu0 %1765
  %1767 = vmax.xlane.f32.xlu0 %v1751
  %v1768 = vpop.xlane.xlu0 %1767
  %1769 = vmax.xlane.f32.xlu0 %v1753
  %v1770 = vpop.xlane.xlu0 %1769
  %1771 = vmax.xlane.f32.xlu0 %v1755
  %v1772 = vpop.xlane.xlu0 %1771
  %1773 = vmax.xlane.f32.xlu0 %v1757
  %v1774 = vpop.xlane.xlu0 %1773
  %1775 = vmax.xlane.f32.xlu0 %v1759
  %v1776 = vpop.xlane.xlu0 %1775
  %1777 = vmax.xlane.f32.xlu0 %v1761
  %v1778 = vpop.xlane.xlu0 %1777
  %1779 = vmax.xlane.f32.xlu0 %v1763
  %v1780 = vpop.xlane.xlu0 %1779
  %1781 = vmax.xlane.f32.xlu0 %v1750
  %v1782 = vpop.xlane.xlu0 %1781
  %1783 = vmax.xlane.f32.xlu0 %v1752
  %v1784 = vpop.xlane.xlu0 %1783
  %1785 = vmax.xlane.f32.xlu0 %v1754
  %v1786 = vpop.xlane.xlu0 %1785
  %1787 = vmax.xlane.f32.xlu0 %v1756
  %v1788 = vpop.xlane.xlu0 %1787
  %1789 = vmax.xlane.f32.xlu0 %v1758
  %v1790 = vpop.xlane.xlu0 %1789
  %1791 = vmax.xlane.f32.xlu0 %v1760
  %v1792 = vpop.xlane.xlu0 %1791
  %1793 = vmax.xlane.f32.xlu0 %v1762
  %v1794 = vpop.xlane.xlu0 %1793
  %1795 = vmax.xlane.f32.xlu0 %v1764
  %v1796 = vpop.xlane.xlu0 %1795
  %vm1797 = vcmask 7168
  %v1798 = vsel %vm1797, %v1766, %v1782
  %v1799 = vsel %vm1797, %v1768, %v1784
  %v1800 = vsel %vm1797, %v1770, %v1786
  %v1801 = vsel %vm1797, %v1772, %v1788
  %v1802 = vsel %vm1797, %v1774, %v1790
  %v1803 = vsel %vm1797, %v1776, %v1792
  %v1804 = vsel %vm1797, %v1778, %v1794
  %v1805 = vsel %vm1797, %v1780, %v1796
  %vm1806 = vcmask 15360
  %1807 = vst.msk [vmem:[%s22] sm:$0xff] %vm1806, %v1798
  %1808 = vst.msk [vmem:[%s22 + $0x8] sm:$0xff] %vm1806, %v1799
  %1809 = vst.msk [vmem:[%s22 + $0x10] sm:$0xff] %vm1806, %v1800
  %1810 = vst.msk [vmem:[%s22 + $0x18] sm:$0xff] %vm1806, %v1801
  %1811 = vst.msk [vmem:[%s22 + $0x20] sm:$0xff] %vm1806, %v1802
  %1812 = vst.msk [vmem:[%s22 + $0x28] sm:$0xff] %vm1806, %v1803
  %1813 = vst.msk [vmem:[%s22 + $0x30] sm:$0xff] %vm1806, %v1804
  %1814 = vst.msk [vmem:[%s22 + $0x38] sm:$0xff] %vm1806, %v1805
  // Predicated region
  $region90: #{sbp_raw_encoder_forward.1} parent=0 // pred_check
    _
  $region91: #{sbp_raw_encoder_forward.1} parent=0 // pred_check_branch
    %1816 = sbr.rel (0) target = $region93
  $region92: #{sbp_raw_encoder_forward.1} parent=0 // pred_region
    _
  $region93: #{sbp_raw_encoder_forward.1} parent=0 // pred_fallthru
    _
  // Predicated region
  $region94: #{sbp_raw_encoder_forward.1} parent=0 // pred_check
    _
  $region95: #{sbp_raw_encoder_forward.1} parent=0 // pred_check_branch
    %1818 = sbr.rel (0) target = $region97
  $region96: #{sbp_raw_encoder_forward.1} parent=0 // pred_region
    _
  $region97: #{sbp_raw_encoder_forward.1} parent=0 // pred_fallthru
    _

</llo_original>
